<compile_context>
chip_gen: v5e
topology: v5e:2x2
jax: 0.10.0
libtpu: 0.0.40
codegen_flags: <defaults>
</compile_context>

<pallas_src>
import numpy as np
import jax
import jax.numpy as jnp
from jax import lax
from jax.experimental import pallas as pl
from jax.experimental.pallas import tpu as pltpu


def _bilinear_matrix(n_in, n_out):
    """Row-interpolation matrix for torch.nn.Upsample(mode='bilinear', align_corners=True)."""
    if n_out == 1:
        A = np.zeros((1, n_in), np.float32)
        A[0, 0] = 1.0
        return A
    src = np.arange(n_out, dtype=np.float64) * (n_in - 1) / (n_out - 1)
    i0 = np.clip(np.floor(src).astype(np.int64), 0, n_in - 1)
    i1 = np.minimum(i0 + 1, n_in - 1)
    frac = (src - i0).astype(np.float32)
    A = np.zeros((n_out, n_in), np.float32)
    A[np.arange(n_out), i0] += 1.0 - frac
    A[np.arange(n_out), i1] += frac
    return A


def make_up_conv(C_in, C_out, H, W, eps=1e-5):
    """Build the Pallas up_conv forward for a fixed shape. Constants are created once here."""
    H2, W2 = 2 * H, 2 * W
    HW2 = H2 * W2
    Hp = H2 + 4                      # 2 zero rows above + H2 data rows + 2 zero rows below
    P = Hp * W2

    # --- host-side constants (built once, become compile-time constants under jit) ---
    A_w = _bilinear_matrix(W, W2)                          # (W2, W)
    A_h = _bilinear_matrix(H, H2)                          # (H2, H)
    A_h_pad = np.zeros((Hp, H), np.float32)
    A_h_pad[2:H2 + 2] = A_h                                # zero row-padding folded in
    awT_c = jnp.asarray(A_w.T)                             # (W, W2)
    ahp_c = jnp.asarray(A_h_pad)                           # (Hp, H)

    # Column-boundary masks for the kw=0 / kw=2 tap groups (suppress row wrap-around).
    jj = np.arange(HW2)
    mask_c = jnp.asarray(
        np.stack([(jj % W2 != 0), (jj % W2 != W2 - 1)]).astype(np.float32))    # (2, HW2)

    def kernel(x_ref, awT_ref, ahp_ref, wg_ref, mask_ref, bias_ref, o_ref):
        # --- 1) separable bilinear 2x upsample ---
        # stage 1: width upsample, fat-M matmul (M = C_in*H)
        xw = jnp.dot(x_ref[0], awT_ref[...],
                     preferred_element_type=jnp.float32)                       # (C_in*H, W2)
        # stage 2: height upsample per channel (zero row-padding folded into A_h_pad),
        # then flatten once to the channel-major padded map used by the conv.
        chans = [
            jnp.dot(ahp_ref[...], xw[c * H:(c + 1) * H, :],
                    preferred_element_type=jnp.float32)                        # (Hp, W2)
            for c in range(C_in)
        ]
        pflat = jnp.stack(chans, axis=0).reshape(C_in, P)                      # (C_in, P)

        # --- 2) 3x3 conv (padding=1) as 3 K-stacked MXU matmuls (one per kw group) ---
        # Hoisted +/-1 lane shifts: base_kw[:, j] == pflat[:, j + (kw - 1)].
        # Wrap-around lanes of the rolls fall only in padded regions never read by the slices.
        bases = (
            pltpu.roll(pflat, shift=1, axis=1),        # kw = 0  (reads column ow-1)
            pflat,                                     # kw = 1
            pltpu.roll(pflat, shift=P - 1, axis=1),    # kw = 2  (reads column ow+1)
        )
        acc = jnp.zeros((C_out, HW2), jnp.float32)
        for kw in range(3):
            b = bases[kw]
            # Stack the 3 kh-shifted windows along K -> (3*C_in, HW2), one matmul per group.
            S = jnp.concatenate(
                [b[:, (kh + 1) * W2:(kh + 1) * W2 + HW2] for kh in range(3)], axis=0)
            part = jnp.dot(wg_ref[kw], S, preferred_element_type=jnp.float32)  # (C_out, HW2)
            if kw == 0:
                part = part * mask_ref[0:1, :]   # zero contributions that wrapped at ow == 0
            elif kw == 2:
                part = part * mask_ref[1:2, :]   # zero contributions that wrapped at ow == W2-1
            acc = acc + part

        # --- 3) epilogue: BN scale already folded into weights -> bias add + ReLU ---
        y = acc + bias_ref[...]                                                # (C_out, HW2)
        o_ref[0] = jnp.maximum(y, 0.0).astype(o_ref.dtype)

    def forward(x, conv_w, conv_b, bn_gamma, bn_beta, bn_mean, bn_var):
        N = x.shape[0]

        # Fold conv bias + BatchNorm (eval mode) into per-channel bias; fold the BN scale
        # into the tap weights so the kernel epilogue is add + ReLU only.
        scale = (bn_gamma / jnp.sqrt(bn_var + eps)).astype(jnp.float32)        # (C_out,)
        bias = (bn_beta + scale * (conv_b - bn_mean)).astype(jnp.float32).reshape(C_out, 1)
        w_s = conv_w.astype(jnp.float32) * scale[:, None, None, None]          # (C_out, C_in, 3, 3)
        # wg[kw, co, kh*C_in + c] = w_s[co, c, kh, kw]  (matches the K-stacked operand rows)
        wg = jnp.transpose(w_s, (3, 0, 2, 1)).reshape(3, C_out, 3 * C_in)

        x2 = x.astype(jnp.float32).reshape(N, C_in * H, W)   # free contiguous NCHW reshape

        out_flat = pl.pallas_call(
            kernel,
            out_shape=jax.ShapeDtypeStruct((N, C_out, HW2), jnp.float32),
            grid=(N,),
            in_specs=[
                pl.BlockSpec((1, C_in * H, W), lambda n: (n, 0, 0)),     # x (per batch element)
                pl.BlockSpec((W, W2), lambda n: (0, 0)),                 # A_w^T (width upsample)
                pl.BlockSpec((Hp, H), lambda n: (0, 0)),                 # padded A_h (height upsample)
                pl.BlockSpec((3, C_out, 3 * C_in), lambda n: (0, 0, 0)), # K-stacked tap weights
                pl.BlockSpec((2, HW2), lambda n: (0, 0)),                # boundary masks
                pl.BlockSpec((C_out, 1), lambda n: (0, 0)),              # fused BN/conv bias
            ],
            out_specs=pl.BlockSpec((1, C_out, HW2), lambda n: (n, 0, 0)),  # lane-dense output
            compiler_params=pltpu.CompilerParams(dimension_semantics=("parallel",)),
        )(x2, awT_c, ahp_c, wg, mask_c, bias)

        return out_flat.reshape(N, C_out, H2, W2)

    return forward


def up_conv_reference(x, conv_w, conv_b, bn_gamma, bn_beta, bn_mean, bn_var, eps=1e-5):
    N, C_in, H, W = x.shape
    H2, W2 = 2 * H, 2 * W
    A_h = jnp.asarray(_bilinear_matrix(H, H2))
    A_w = jnp.asarray(_bilinear_matrix(W, W2))
    up = jnp.einsum('ph,nchw,qw->ncpq', A_h, x, A_w)
    z = lax.conv_general_dilated(up, conv_w, (1, 1), ((1, 1), (1, 1)),
                                 dimension_numbers=('NCHW', 'OIHW', 'NCHW'))
    z = z + conv_b[None, :, None, None]
    y = (z - bn_mean[None, :, None, None]) / jnp.sqrt(bn_var + eps)[None, :, None, None]
    y = y * bn_gamma[None, :, None, None] + bn_beta[None, :, None, None]
    return jnp.maximum(y, 0.0)


if __name__ == "__main__":
    N, C_in, C_out, H, W = 2, 4, 8, 16, 16

    key = jax.random.PRNGKey(0)
    kx, kw, kb = jax.random.split(key, 3)
    x = jax.random.normal(kx, (N, C_in, H, W), jnp.float32)
    conv_w = jax.random.normal(kw, (C_out, C_in, 3, 3), jnp.float32) / np.sqrt(C_in * 9)
    conv_b = jax.random.normal(kb, (C_out,), jnp.float32) * 0.1
    # BatchNorm2d default init (eval mode): gamma=1, beta=0, running_mean=0, running_var=1
    bn_gamma = jnp.ones((C_out,), jnp.float32)
    bn_beta = jnp.zeros((C_out,), jnp.float32)
    bn_mean = jnp.zeros((C_out,), jnp.float32)
    bn_var = jnp.ones((C_out,), jnp.float32)

    up_conv_forward = jax.jit(make_up_conv(C_in, C_out, H, W))
    out = up_conv_forward(x, conv_w, conv_b, bn_gamma, bn_beta, bn_mean, bn_var)
    out = jax.block_until_ready(out)

    ref = up_conv_reference(x, conv_w, conv_b, bn_gamma, bn_beta, bn_mean, bn_var)
    assert out.shape == (N, C_out, 2 * H, 2 * W)
    # tolerance allows for MXU default-precision rounding differences vs the XLA reference
    if not np.allclose(np.asarray(out), np.asarray(ref), atol=2e-4, rtol=2e-4):
        raise AssertionError("Pallas kernel output does not match JAX reference")

    print("KERNEL_OK")
</pallas_src>

<mosaic_0001>
module attributes {stable_mosaic.version = 11 : i64} {
  func.func @kernel(%arg0: i32, %arg1: memref<1x64x16xf32, #tpu.memory_space<vmem>>, %arg2: memref<16x32xf32, #tpu.memory_space<vmem>>, %arg3: memref<36x16xf32, #tpu.memory_space<vmem>>, %arg4: memref<3x8x12xf32, #tpu.memory_space<vmem>>, %arg5: memref<2x1024xf32, #tpu.memory_space<vmem>>, %arg6: memref<8x1xf32, #tpu.memory_space<vmem>>, %arg7: memref<1x8x1024xf32, #tpu.memory_space<vmem>>) attributes {dimension_semantics = [#tpu.dimension_semantics<parallel>], iteration_bounds = array<i64: 2>, scalar_prefetch = 0 : i64, scratch_operands = 0 : i64, tpu.core_type = #tpu.core_type<tc>, window_params = [{transform_indices = @transform_0, window_bounds = array<i64: 1, 64, 16>}, {pipeline_mode = #tpu.pipeline_mode<synchronous>, transform_indices = @transform_1, window_bounds = array<i64: 16, 32>}, {pipeline_mode = #tpu.pipeline_mode<synchronous>, transform_indices = @transform_2, window_bounds = array<i64: 36, 16>}, {pipeline_mode = #tpu.pipeline_mode<synchronous>, transform_indices = @transform_3, window_bounds = array<i64: 3, 8, 12>}, {pipeline_mode = #tpu.pipeline_mode<synchronous>, transform_indices = @transform_4, window_bounds = array<i64: 2, 1024>}, {pipeline_mode = #tpu.pipeline_mode<synchronous>, transform_indices = @transform_5, window_bounds = array<i64: 8, 1>}, {transform_indices = @transform_6, window_bounds = array<i64: 1, 8, 1024>}]} {
    %c0 = arith.constant 0 : index
    %c0_0 = arith.constant 0 : index
    %c0_1 = arith.constant 0 : index
    %0 = vector.load %arg1[%c0, %c0_0, %c0_1] : memref<1x64x16xf32, #tpu.memory_space<vmem>>, vector<1x64x16xf32>
    %1 = vector.shape_cast %0 : vector<1x64x16xf32> to vector<64x16xf32>
    %c0_2 = arith.constant 0 : index
    %c0_3 = arith.constant 0 : index
    %2 = vector.load %arg2[%c0_2, %c0_3] : memref<16x32xf32, #tpu.memory_space<vmem>>, vector<16x32xf32>
    %cst = arith.constant dense<0.000000e+00> : vector<64x32xf32>
    %3 = tpu.matmul %1, %2, %cst {dimension_numbers = #tpu.dot_dimension_numbers<[1], [0], [0], [1], [0, 0, 1, 1], [], []>} : vector<64x16xf32>, vector<16x32xf32>, vector<64x32xf32> -> vector<64x32xf32>
    %c0_4 = arith.constant 0 : index
    %c0_5 = arith.constant 0 : index
    %4 = vector.load %arg3[%c0_4, %c0_5] : memref<36x16xf32, #tpu.memory_space<vmem>>, vector<36x16xf32>
    %5 = vector.extract_strided_slice %3 {offsets = [0, 0], sizes = [16, 32], strides = [1, 1]} : vector<64x32xf32> to vector<16x32xf32>
    %cst_6 = arith.constant dense<0.000000e+00> : vector<36x32xf32>
    %6 = tpu.matmul %4, %5, %cst_6 {dimension_numbers = #tpu.dot_dimension_numbers<[1], [0], [0], [1], [0, 0, 1, 1], [], []>} : vector<36x16xf32>, vector<16x32xf32>, vector<36x32xf32> -> vector<36x32xf32>
    %c0_7 = arith.constant 0 : index
    %c0_8 = arith.constant 0 : index
    %7 = vector.load %arg3[%c0_7, %c0_8] : memref<36x16xf32, #tpu.memory_space<vmem>>, vector<36x16xf32>
    %8 = vector.extract_strided_slice %3 {offsets = [16, 0], sizes = [16, 32], strides = [1, 1]} : vector<64x32xf32> to vector<16x32xf32>
    %cst_9 = arith.constant dense<0.000000e+00> : vector<36x32xf32>
    %9 = tpu.matmul %7, %8, %cst_9 {dimension_numbers = #tpu.dot_dimension_numbers<[1], [0], [0], [1], [0, 0, 1, 1], [], []>} : vector<36x16xf32>, vector<16x32xf32>, vector<36x32xf32> -> vector<36x32xf32>
    %c0_10 = arith.constant 0 : index
    %c0_11 = arith.constant 0 : index
    %10 = vector.load %arg3[%c0_10, %c0_11] : memref<36x16xf32, #tpu.memory_space<vmem>>, vector<36x16xf32>
    %11 = vector.extract_strided_slice %3 {offsets = [32, 0], sizes = [16, 32], strides = [1, 1]} : vector<64x32xf32> to vector<16x32xf32>
    %cst_12 = arith.constant dense<0.000000e+00> : vector<36x32xf32>
    %12 = tpu.matmul %10, %11, %cst_12 {dimension_numbers = #tpu.dot_dimension_numbers<[1], [0], [0], [1], [0, 0, 1, 1], [], []>} : vector<36x16xf32>, vector<16x32xf32>, vector<36x32xf32> -> vector<36x32xf32>
    %c0_13 = arith.constant 0 : index
    %c0_14 = arith.constant 0 : index
    %13 = vector.load %arg3[%c0_13, %c0_14] : memref<36x16xf32, #tpu.memory_space<vmem>>, vector<36x16xf32>
    %14 = vector.extract_strided_slice %3 {offsets = [48, 0], sizes = [16, 32], strides = [1, 1]} : vector<64x32xf32> to vector<16x32xf32>
    %cst_15 = arith.constant dense<0.000000e+00> : vector<36x32xf32>
    %15 = tpu.matmul %13, %14, %cst_15 {dimension_numbers = #tpu.dot_dimension_numbers<[1], [0], [0], [1], [0, 0, 1, 1], [], []>} : vector<36x16xf32>, vector<16x32xf32>, vector<36x32xf32> -> vector<36x32xf32>
    %16 = vector.shape_cast %6 : vector<36x32xf32> to vector<1x36x32xf32>
    %17 = vector.shape_cast %9 : vector<36x32xf32> to vector<1x36x32xf32>
    %18 = vector.shape_cast %12 : vector<36x32xf32> to vector<1x36x32xf32>
    %19 = vector.shape_cast %15 : vector<36x32xf32> to vector<1x36x32xf32>
    %20 = tpu.concatenate %16, %17, %18, %19 in 0 : vector<1x36x32xf32>, vector<1x36x32xf32>, vector<1x36x32xf32>, vector<1x36x32xf32> -> vector<4x36x32xf32>
    %21 = vector.shape_cast %20 : vector<4x36x32xf32> to vector<4x1152xf32>
    %c1_i32 = arith.constant 1 : i32
    %22 = tpu.dynamic_rotate %21 by %c1_i32 dim 1 : vector<4x1152xf32>, i32 -> vector<4x1152xf32>
    %c1151_i32 = arith.constant 1151 : i32
    %23 = tpu.dynamic_rotate %21 by %c1151_i32 dim 1 : vector<4x1152xf32>, i32 -> vector<4x1152xf32>
    %cst_16 = arith.constant 0.000000e+00 : f32
    %24 = vector.broadcast %cst_16 : f32 to vector<8x1024xf32>
    %25 = vector.extract_strided_slice %22 {offsets = [0, 32], sizes = [4, 1024], strides = [1, 1]} : vector<4x1152xf32> to vector<4x1024xf32>
    %26 = vector.extract_strided_slice %22 {offsets = [0, 64], sizes = [4, 1024], strides = [1, 1]} : vector<4x1152xf32> to vector<4x1024xf32>
    %27 = vector.extract_strided_slice %22 {offsets = [0, 96], sizes = [4, 1024], strides = [1, 1]} : vector<4x1152xf32> to vector<4x1024xf32>
    %28 = tpu.concatenate %25, %26, %27 in 0 : vector<4x1024xf32>, vector<4x1024xf32>, vector<4x1024xf32> -> vector<12x1024xf32>
    %c0_17 = arith.constant 0 : index
    %c0_18 = arith.constant 0 : index
    %c0_19 = arith.constant 0 : index
    %29 = vector.load %arg4[%c0_17, %c0_18, %c0_19] : memref<3x8x12xf32, #tpu.memory_space<vmem>>, vector<1x8x12xf32>
    %30 = vector.shape_cast %29 : vector<1x8x12xf32> to vector<8x12xf32>
    %cst_20 = arith.constant dense<0.000000e+00> : vector<8x1024xf32>
    %31 = tpu.matmul %30, %28, %cst_20 {dimension_numbers = #tpu.dot_dimension_numbers<[1], [0], [0], [1], [0, 0, 1, 1], [], []>} : vector<8x12xf32>, vector<12x1024xf32>, vector<8x1024xf32> -> vector<8x1024xf32>
    %c0_21 = arith.constant 0 : index
    %c0_22 = arith.constant 0 : index
    %32 = vector.load %arg5[%c0_21, %c0_22] : memref<2x1024xf32, #tpu.memory_space<vmem>>, vector<1x1024xf32>
    %33 = vector.broadcast %32 : vector<1x1024xf32> to vector<8x1024xf32>
    %34 = arith.mulf %31, %33 : vector<8x1024xf32>
    %35 = arith.addf %24, %34 : vector<8x1024xf32>
    %36 = vector.extract_strided_slice %21 {offsets = [0, 32], sizes = [4, 1024], strides = [1, 1]} : vector<4x1152xf32> to vector<4x1024xf32>
    %37 = vector.extract_strided_slice %21 {offsets = [0, 64], sizes = [4, 1024], strides = [1, 1]} : vector<4x1152xf32> to vector<4x1024xf32>
    %38 = vector.extract_strided_slice %21 {offsets = [0, 96], sizes = [4, 1024], strides = [1, 1]} : vector<4x1152xf32> to vector<4x1024xf32>
    %39 = tpu.concatenate %36, %37, %38 in 0 : vector<4x1024xf32>, vector<4x1024xf32>, vector<4x1024xf32> -> vector<12x1024xf32>
    %c1 = arith.constant 1 : index
    %c0_23 = arith.constant 0 : index
    %c0_24 = arith.constant 0 : index
    %40 = vector.load %arg4[%c1, %c0_23, %c0_24] : memref<3x8x12xf32, #tpu.memory_space<vmem>>, vector<1x8x12xf32>
    %41 = vector.shape_cast %40 : vector<1x8x12xf32> to vector<8x12xf32>
    %cst_25 = arith.constant dense<0.000000e+00> : vector<8x1024xf32>
    %42 = tpu.matmul %41, %39, %cst_25 {dimension_numbers = #tpu.dot_dimension_numbers<[1], [0], [0], [1], [0, 0, 1, 1], [], []>} : vector<8x12xf32>, vector<12x1024xf32>, vector<8x1024xf32> -> vector<8x1024xf32>
    %43 = arith.addf %35, %42 : vector<8x1024xf32>
    %44 = vector.extract_strided_slice %23 {offsets = [0, 32], sizes = [4, 1024], strides = [1, 1]} : vector<4x1152xf32> to vector<4x1024xf32>
    %45 = vector.extract_strided_slice %23 {offsets = [0, 64], sizes = [4, 1024], strides = [1, 1]} : vector<4x1152xf32> to vector<4x1024xf32>
    %46 = vector.extract_strided_slice %23 {offsets = [0, 96], sizes = [4, 1024], strides = [1, 1]} : vector<4x1152xf32> to vector<4x1024xf32>
    %47 = tpu.concatenate %44, %45, %46 in 0 : vector<4x1024xf32>, vector<4x1024xf32>, vector<4x1024xf32> -> vector<12x1024xf32>
    %c2 = arith.constant 2 : index
    %c0_26 = arith.constant 0 : index
    %c0_27 = arith.constant 0 : index
    %48 = vector.load %arg4[%c2, %c0_26, %c0_27] : memref<3x8x12xf32, #tpu.memory_space<vmem>>, vector<1x8x12xf32>
    %49 = vector.shape_cast %48 : vector<1x8x12xf32> to vector<8x12xf32>
    %cst_28 = arith.constant dense<0.000000e+00> : vector<8x1024xf32>
    %50 = tpu.matmul %49, %47, %cst_28 {dimension_numbers = #tpu.dot_dimension_numbers<[1], [0], [0], [1], [0, 0, 1, 1], [], []>} : vector<8x12xf32>, vector<12x1024xf32>, vector<8x1024xf32> -> vector<8x1024xf32>
    %c1_29 = arith.constant 1 : index
    %c0_30 = arith.constant 0 : index
    %51 = vector.load %arg5[%c1_29, %c0_30] : memref<2x1024xf32, #tpu.memory_space<vmem>>, vector<1x1024xf32>
    %52 = vector.broadcast %51 : vector<1x1024xf32> to vector<8x1024xf32>
    %53 = arith.mulf %50, %52 : vector<8x1024xf32>
    %54 = arith.addf %43, %53 : vector<8x1024xf32>
    %c0_31 = arith.constant 0 : index
    %c0_32 = arith.constant 0 : index
    %55 = vector.load %arg6[%c0_31, %c0_32] : memref<8x1xf32, #tpu.memory_space<vmem>>, vector<8x1xf32>
    %56 = vector.broadcast %55 : vector<8x1xf32> to vector<8x1024xf32>
    %57 = arith.addf %54, %56 : vector<8x1024xf32>
    %cst_33 = arith.constant 0.000000e+00 : f32
    %58 = vector.broadcast %cst_33 : f32 to vector<8x1024xf32>
    %59 = arith.maximumf %57, %58 : vector<8x1024xf32>
    %c0_34 = arith.constant 0 : index
    %c0_35 = arith.constant 0 : index
    %c0_36 = arith.constant 0 : index
    %60 = vector.load %arg7[%c0_34, %c0_35, %c0_36] : memref<1x8x1024xf32, #tpu.memory_space<vmem>>, vector<1x8x1024xf32>
    %61 = vector.shape_cast %60 : vector<1x8x1024xf32> to vector<8x1024xf32>
    %62 = vector.shape_cast %59 : vector<8x1024xf32> to vector<1x8x1024xf32>
    tpu.vector_store %arg7[%c0_34, %c0_35, %c0_36], %62 {strides = array<i32>} : memref<1x8x1024xf32, #tpu.memory_space<vmem>>, vector<1x8x1024xf32>,
    return
  }
  func.func @transform_0(%arg0: i32) -> (i32, i32, i32) {
    %c0_i32 = arith.constant 0 : i32
    %c0_i32_0 = arith.constant 0 : i32
    %c0_i32_1 = arith.constant 0 : i32
    return %arg0, %c0_i32, %c0_i32_0 : i32, i32, i32
  }
  func.func @transform_1(%arg0: i32) -> (i32, i32) {
    %c0_i32 = arith.constant 0 : i32
    %c0_i32_0 = arith.constant 0 : i32
    %c0_i32_1 = arith.constant 0 : i32
    return %c0_i32, %c0_i32_0 : i32, i32
  }
  func.func @transform_2(%arg0: i32) -> (i32, i32) {
    %c0_i32 = arith.constant 0 : i32
    %c0_i32_0 = arith.constant 0 : i32
    %c0_i32_1 = arith.constant 0 : i32
    return %c0_i32, %c0_i32_0 : i32, i32
  }
  func.func @transform_3(%arg0: i32) -> (i32, i32, i32) {
    %c0_i32 = arith.constant 0 : i32
    %c0_i32_0 = arith.constant 0 : i32
    %c0_i32_1 = arith.constant 0 : i32
    %c0_i32_2 = arith.constant 0 : i32
    return %c0_i32, %c0_i32_0, %c0_i32_1 : i32, i32, i32
  }
  func.func @transform_4(%arg0: i32) -> (i32, i32) {
    %c0_i32 = arith.constant 0 : i32
    %c0_i32_0 = arith.constant 0 : i32
    %c0_i32_1 = arith.constant 0 : i32
    return %c0_i32, %c0_i32_0 : i32, i32
  }
  func.func @transform_5(%arg0: i32) -> (i32, i32) {
    %c0_i32 = arith.constant 0 : i32
    %c0_i32_0 = arith.constant 0 : i32
    %c0_i32_1 = arith.constant 0 : i32
    return %c0_i32, %c0_i32_0 : i32, i32
  }
  func.func @transform_6(%arg0: i32) -> (i32, i32, i32) {
    %c0_i32 = arith.constant 0 : i32
    %c0_i32_0 = arith.constant 0 : i32
    %c0_i32_1 = arith.constant 0 : i32
    return %arg0, %c0_i32, %c0_i32_0 : i32, i32, i32
  }
}

</mosaic_0001>

<llo_original>
// kernel: forward.1
$region0: #{forward.1}
  #allocation0 [shape = 'u32[]', space=smem, size = 0x4, offset = 0x4, fixed_abs, tag = 'smem constant byte address 0x4 - core index']
  #allocation1 [shape = 'u32[72,128]{1,0:T(1,128)}', space=vmem, size = 0x9000, scoped, tag = 'internal scratch']
  %s0 = inlined_call_operand.vmem [shape: f32[2,64,16], index: 0, kind: input, shape index: {}]
  %s1 = inlined_call_operand.vmem [shape: f32[16,32], index: 1, kind: input, shape index: {}]
  %s2 = inlined_call_operand.vmem [shape: f32[36,16], index: 2, kind: input, shape index: {}]
  %s3 = inlined_call_operand.vmem [shape: f32[3,8,12], index: 3, kind: input, shape index: {}]
  %s4 = inlined_call_operand.vmem [shape: f32[2,1024], index: 4, kind: input, shape index: {}]
  %s5 = inlined_call_operand.vmem [shape: f32[8,1], index: 5, kind: input, shape index: {}]
  %s6 = inlined_call_operand.vmem [shape: f32[2,8,1024], index: 6, kind: output, shape index: {}]
  %s7 = sld [smem:[#allocation0]]
  $region57: #{forward.1} parent=0
    _
  %s9 = ssub.s32 1, %s7
  %s10 = scalar_select 0, %s9, %s7
  loop: start=0, step=1, limit=4
  $region2: #{forward.1} parent=0 // loop_pre_header
    _
  $region3: #{forward.1} parent=0 // loop_header
    %s12 = sphi 0, %s16
    %p13 = scmp.ge.s32.totalorder %s12, 4
    %s22 = sphi 0, %s24
    %s25 = sphi 0, %s22
    %s26 = sphi 0, %s25
    %s42 = sphi 0, %s26
    %s46 = sphi 0, %s46
    %s48 = sphi 0, %s46
    %s49 = sphi 0, %s48
    %s63 = sphi 0, %s49
    %s67 = sphi 0, %s67
    %s69 = sphi 0, %s67
    %s70 = sphi 0, %s69
    %s84 = sphi 0, %s70
    %s88 = sphi 0, %s88
    %s90 = sphi 0, %s88
    %s91 = sphi 0, %s90
    %s105 = sphi 0, %s91
    %s109 = sphi 0, %s109
    %s111 = sphi 0, %s109
    %s112 = sphi 0, %s111
    %s126 = sphi 0, %s112
    %s130 = sphi 0, %s130
    %s132 = sphi 0, %s130
    %s133 = sphi 0, %s132
    %s147 = sphi 0, %s133
    %s153 = sphi 0, %s155
    %s156 = sphi 0, %s153
    %s157 = sphi 0, %s156
    %s173 = sphi 0, %s157
  $region4: #{forward.1} parent=0 // loop_header_branch
    %15 = sbr.rel (%p13) target = $region8
  $region5: #{forward.1} parent=0 // loop_body
    %s17 = ssub.s32 %s12, 1
    %s18 = ssub.s32 %s12, 2
    %s19 = sadd.s32 %s12, 1
    %s20 = ssub.s32 %s12, %s19
    %p21 = scmp.eq.s32.totalorder %s20, 0
    %s23 = sadd.s32 %s22, 1
    %s24 = scalar_select %p21, %s22, %s23
    %p27 = pneg %p21
    %p28 = scmp.eq.s32.totalorder %s12, 1
    %p29 = por %p27, %p28
    %p30 = scmp.ne.s32.totalorder %s22, %s25
    %p31 = scmp.eq.s32.totalorder %s12, 0
    %p32 = por %p30, %p31
    %p33 = scmp.ne.s32.totalorder %s22, %s25
    %p34 = scmp.eq.s32.totalorder %s17, 1
    %p35 = por %p33, %p34
    %p36 = scmp.ne.s32.totalorder %s25, %s26
    %p37 = scmp.eq.s32.totalorder %s17, 0
    %p38 = por %p36, %p37
    %p39 = scmp.ne.s32.totalorder %s25, %s26
    %p40 = scmp.eq.s32.totalorder %s18, 1
    %p41 = por %p39, %p40
    %p43 = scmp.ne.s32.totalorder %s26, %s42
    %p44 = scmp.eq.s32.totalorder %s18, 0
    %p45 = por %p43, %p44
    %s47 = sadd.s32 %s46, 1
    %p50 = scmp.eq.s32.totalorder %s12, 1
    %p51 = scmp.ne.s32.totalorder %s46, %s48
    %p52 = scmp.eq.s32.totalorder %s12, 0
    %p53 = por %p51, %p52
    %p54 = scmp.ne.s32.totalorder %s46, %s48
    %p55 = scmp.eq.s32.totalorder %s17, 1
    %p56 = por %p54, %p55
    %p57 = scmp.ne.s32.totalorder %s48, %s49
    %p58 = scmp.eq.s32.totalorder %s17, 0
    %p59 = por %p57, %p58
    %p60 = scmp.ne.s32.totalorder %s48, %s49
    %p61 = scmp.eq.s32.totalorder %s18, 1
    %p62 = por %p60, %p61
    %p64 = scmp.ne.s32.totalorder %s49, %s63
    %p65 = scmp.eq.s32.totalorder %s18, 0
    %p66 = por %p64, %p65
    %s68 = sadd.s32 %s67, 1
    %p71 = scmp.eq.s32.totalorder %s12, 1
    %p72 = scmp.ne.s32.totalorder %s67, %s69
    %p73 = scmp.eq.s32.totalorder %s12, 0
    %p74 = por %p72, %p73
    %p75 = scmp.ne.s32.totalorder %s67, %s69
    %p76 = scmp.eq.s32.totalorder %s17, 1
    %p77 = por %p75, %p76
    %p78 = scmp.ne.s32.totalorder %s69, %s70
    %p79 = scmp.eq.s32.totalorder %s17, 0
    %p80 = por %p78, %p79
    %p81 = scmp.ne.s32.totalorder %s69, %s70
    %p82 = scmp.eq.s32.totalorder %s18, 1
    %p83 = por %p81, %p82
    %p85 = scmp.ne.s32.totalorder %s70, %s84
    %p86 = scmp.eq.s32.totalorder %s18, 0
    %p87 = por %p85, %p86
    %s89 = sadd.s32 %s88, 1
    %p92 = scmp.eq.s32.totalorder %s12, 1
    %p93 = scmp.ne.s32.totalorder %s88, %s90
    %p94 = scmp.eq.s32.totalorder %s12, 0
    %p95 = por %p93, %p94
    %p96 = scmp.ne.s32.totalorder %s88, %s90
    %p97 = scmp.eq.s32.totalorder %s17, 1
    %p98 = por %p96, %p97
    %p99 = scmp.ne.s32.totalorder %s90, %s91
    %p100 = scmp.eq.s32.totalorder %s17, 0
    %p101 = por %p99, %p100
    %p102 = scmp.ne.s32.totalorder %s90, %s91
    %p103 = scmp.eq.s32.totalorder %s18, 1
    %p104 = por %p102, %p103
    %p106 = scmp.ne.s32.totalorder %s91, %s105
    %p107 = scmp.eq.s32.totalorder %s18, 0
    %p108 = por %p106, %p107
    %s110 = sadd.s32 %s109, 1
    %p113 = scmp.eq.s32.totalorder %s12, 1
    %p114 = scmp.ne.s32.totalorder %s109, %s111
    %p115 = scmp.eq.s32.totalorder %s12, 0
    %p116 = por %p114, %p115
    %p117 = scmp.ne.s32.totalorder %s109, %s111
    %p118 = scmp.eq.s32.totalorder %s17, 1
    %p119 = por %p117, %p118
    %p120 = scmp.ne.s32.totalorder %s111, %s112
    %p121 = scmp.eq.s32.totalorder %s17, 0
    %p122 = por %p120, %p121
    %p123 = scmp.ne.s32.totalorder %s111, %s112
    %p124 = scmp.eq.s32.totalorder %s18, 1
    %p125 = por %p123, %p124
    %p127 = scmp.ne.s32.totalorder %s112, %s126
    %p128 = scmp.eq.s32.totalorder %s18, 0
    %p129 = por %p127, %p128
    %s131 = sadd.s32 %s130, 1
    %p134 = scmp.eq.s32.totalorder %s12, 1
    %p135 = scmp.ne.s32.totalorder %s130, %s132
    %p136 = scmp.eq.s32.totalorder %s12, 0
    %p137 = por %p135, %p136
    %p138 = scmp.ne.s32.totalorder %s130, %s132
    %p139 = scmp.eq.s32.totalorder %s17, 1
    %p140 = por %p138, %p139
    %p141 = scmp.ne.s32.totalorder %s132, %s133
    %p142 = scmp.eq.s32.totalorder %s17, 0
    %p143 = por %p141, %p142
    %p144 = scmp.ne.s32.totalorder %s132, %s133
    %p145 = scmp.eq.s32.totalorder %s18, 1
    %p146 = por %p144, %p145
    %p148 = scmp.ne.s32.totalorder %s133, %s147
    %p149 = scmp.eq.s32.totalorder %s18, 0
    %p150 = por %p148, %p149
    %s151 = ssub.s32 %s12, %s19
    %p152 = scmp.eq.s32.totalorder %s151, 0
    %s154 = sadd.s32 %s153, 1
    %s155 = scalar_select %p152, %s153, %s154
    %p158 = pneg %p152
    %p159 = scmp.eq.s32.totalorder %s12, 1
    %p160 = por %p158, %p159
    %p161 = scmp.ne.s32.totalorder %s153, %s156
    %p162 = scmp.eq.s32.totalorder %s12, 0
    %p163 = por %p161, %p162
    %p164 = scmp.ne.s32.totalorder %s153, %s156
    %p165 = scmp.eq.s32.totalorder %s17, 1
    %p166 = por %p164, %p165
    %p167 = scmp.ne.s32.totalorder %s156, %s157
    %p168 = scmp.eq.s32.totalorder %s17, 0
    %p169 = por %p167, %p168
    %p170 = scmp.ne.s32.totalorder %s156, %s157
    %p171 = scmp.eq.s32.totalorder %s18, 1
    %p172 = por %p170, %p171
    %p174 = scmp.ne.s32.totalorder %s157, %s173
    %p175 = scmp.eq.s32.totalorder %s18, 0
    %p176 = por %p174, %p175
    %p177 = scmp.le.s32.totalorder 1, %s12
    %p178 = scmp.lt.s32.totalorder %s12, 3
    %p179 = pnand %p177, %p178
    %p180 = pneg %p179
    // Predicated region
    $region9: #{forward.1} parent=5 // pred_check
      _
    $region10: #{forward.1} parent=5 // pred_check_branch
      %182 = sbr.rel (%p179) target = $region12
    $region11: #{forward.1} parent=5 // pred_region
      %s183 = ssub.s32 %s12, 1
      // Predicated region
      $region13: #{forward.1} parent=11 // pred_check
        %p184 = pneg %p59
      $region14: #{forward.1} parent=11 // pred_check_branch
        %186 = sbr.rel (%p184) target = $region16
      $region15: #{forward.1} parent=11 // pred_region
        _
      $region16: #{forward.1} parent=11 // pred_fallthru
        _
      // Predicated region
      $region17: #{forward.1} parent=11 // pred_check
        %p187 = pneg %p80
      $region18: #{forward.1} parent=11 // pred_check_branch
        %189 = sbr.rel (%p187) target = $region20
      $region19: #{forward.1} parent=11 // pred_region
        _
      $region20: #{forward.1} parent=11 // pred_fallthru
        _
      // Predicated region
      $region21: #{forward.1} parent=11 // pred_check
        %p190 = pneg %p101
      $region22: #{forward.1} parent=11 // pred_check_branch
        %192 = sbr.rel (%p190) target = $region24
      $region23: #{forward.1} parent=11 // pred_region
        _
      $region24: #{forward.1} parent=11 // pred_fallthru
        _
      // Predicated region
      $region25: #{forward.1} parent=11 // pred_check
        %p193 = pneg %p122
      $region26: #{forward.1} parent=11 // pred_check_branch
        %195 = sbr.rel (%p193) target = $region28
      $region27: #{forward.1} parent=11 // pred_region
        _
      $region28: #{forward.1} parent=11 // pred_fallthru
        _
      // Predicated region
      $region29: #{forward.1} parent=11 // pred_check
        %p196 = pneg %p143
      $region30: #{forward.1} parent=11 // pred_check_branch
        %198 = sbr.rel (%p196) target = $region32
      $region31: #{forward.1} parent=11 // pred_region
        _
      $region32: #{forward.1} parent=11 // pred_fallthru
        _
    $region12: #{forward.1} parent=5 // pred_fallthru
      _
    %p199 = scmp.lt.s32.totalorder %s12, 2
    // Predicated region
    $region33: #{forward.1} parent=5 // pred_check
      %p200 = pneg %p199
    $region34: #{forward.1} parent=5 // pred_check_branch
      %202 = sbr.rel (%p200) target = $region36
    $region35: #{forward.1} parent=5 // pred_region
      // Predicated region
      $region37: #{forward.1} parent=35 // pred_check
        %p203 = pneg %p32
      $region38: #{forward.1} parent=35 // pred_check_branch
        %205 = sbr.rel (%p203) target = $region40
      $region39: #{forward.1} parent=35 // pred_region
        %p206 = scmp.lt.s32.totalorder %s12, 1
        %s207 = scalar_select %p206, %s12, 1
        %s208 = smul.addr %s207, 8
        %s209 = smul.addr %s208, 8
        %s210 = scalar_lea.vmem %s0, %s209
      $region40: #{forward.1} parent=35 // pred_fallthru
        _
    $region36: #{forward.1} parent=5 // pred_fallthru
      _
    %p211 = scmp.le.s32.totalorder 1, %s12
    %p212 = scmp.lt.s32.totalorder %s12, 3
    %p213 = pnand %p211, %p212
    %p214 = pneg %p213
    // Predicated region
    $region41: #{forward.1} parent=5 // pred_check
      _
    $region42: #{forward.1} parent=5 // pred_check_branch
      %216 = sbr.rel (%p213) target = $region44
    $region43: #{forward.1} parent=5 // pred_region
      %s217 = ssub.s32 %s12, 1
      %p218 = scmp.lt.s32.totalorder %s17, 1
      %s219 = scalar_select %p218, %s17, 1
      %s220 = smul.addr %s219, 8
      %s221 = smul.addr %s220, 8
      %s222 = scalar_lea.vmem %s0, %s221
      %p223 = pneg %p38
      %p224 = pneg %p35
      %p225 = pneg %p59
      %p226 = pneg %p56
      %p227 = pneg %p80
      %p228 = pneg %p77
      %p229 = pneg %p101
      %p230 = pneg %p98
      %p231 = pneg %p122
      %p232 = pneg %p119
      %p233 = pneg %p143
      %p234 = pneg %p140
      %p235 = pneg %p169
      %p236 = pneg %p166
      %p237 = scmp.lt.s32.totalorder %s17, 1
      %s238 = scalar_select %p237, %s17, 1
      %s239 = smul.addr %s238, 8
      %s240 = smul.addr %s239, 8
      %s241 = scalar_lea.vmem %s6, %s240
      %p242 = scmp.lt.s32.totalorder %s17, 1
      %s243 = scalar_select %p242, %s17, 1
      %s244 = smul.addr %s243, 8
      %s245 = smul.addr %s244, 8
      %s246 = scalar_lea.vmem %s0, %s245
      %p247 = scmp.lt.s32.totalorder %s17, 1
      %s248 = scalar_select %p247, %s17, 1
      %s249 = smul.addr %s248, 8
      %s250 = smul.addr %s249, 8
      %s251 = scalar_lea.vmem %s6, %s250
      %v252 = vld [vmem:[%s246] sm:$0xff]
      %v253 = vld [vmem:[%s246 + $0x8] sm:$0xff]
      %v254 = vld [vmem:[%s246 + $0x10] sm:$0xff]
      %v255 = vld [vmem:[%s246 + $0x18] sm:$0xff]
      %v256 = vld [vmem:[%s246 + $0x20] sm:$0xff]
      %v257 = vld [vmem:[%s246 + $0x28] sm:$0xff]
      %v258 = vld [vmem:[%s246 + $0x30] sm:$0xff]
      %v259 = vld [vmem:[%s246 + $0x38] sm:$0xff]
      %v260 = vld [vmem:[%s1] sm:$0xff]
      %v261 = vld [vmem:[%s1 + $0x8] sm:$0xff]
      %vm262 = vcmask 130048
      %v264 = vsel %vm262, %v252, 0
      %v267 = vsel %vm262, %v253, 0
      %v270 = vsel %vm262, %v254, 0
      %v273 = vsel %vm262, %v255, 0
      %v276 = vsel %vm262, %v256, 0
      %v279 = vsel %vm262, %v257, 0
      %v282 = vsel %vm262, %v258, 0
      %v285 = vsel %vm262, %v259, 0
      %287 = vmatpush.msra.mxu0 0.0
      %288 = vmatpush.msra.mxu0 0.0
      %289 = vmatpush.msra.mxu0 0.0
      %290 = vmatpush.msra.mxu0 0.0
      %291 = vmatpush.msra.mxu0 0.0
      %292 = vmatpush.msra.mxu0 0.0
      %293 = vmatpush.msra.mxu0 0.0
      %294 = vmatpush.msra.mxu0 0.0
      %295 = vmatpush.msra.mxu0 0.0
      %296 = vmatpush.msra.mxu0 0.0
      %297 = vmatpush.msra.mxu0 0.0
      %298 = vmatpush.msra.mxu0 0.0
      %299 = vmatpush.msra.mxu0 0.0
      %300 = vmatpush.msra.mxu0 0.0
      %301 = vmatpush.msra.mxu0 %v261
      %302 = vmatpush.msra.mxu0 %v260
      %303 = vmatmul.f32.gmra.mxu0 %v264
      %v304 = vpop.f32.mrf.mxu0
      %v305 = vadd.f32 0.0, %v304
      %306 = vmatmul.f32.gmra.mxu0 %v267
      %v307 = vpop.f32.mrf.mxu0
      %v308 = vadd.f32 0.0, %v307
      %309 = vmatmul.f32.gmra.mxu0 %v270
      %v310 = vpop.f32.mrf.mxu0
      %v311 = vadd.f32 0.0, %v310
      %312 = vmatmul.f32.gmra.mxu0 %v273
      %v313 = vpop.f32.mrf.mxu0
      %v314 = vadd.f32 0.0, %v313
      %315 = vmatmul.f32.gmra.mxu0 %v276
      %v316 = vpop.f32.mrf.mxu0
      %v317 = vadd.f32 0.0, %v316
      %318 = vmatmul.f32.gmra.mxu0 %v279
      %v319 = vpop.f32.mrf.mxu0
      %v320 = vadd.f32 0.0, %v319
      %321 = vmatmul.f32.gmra.mxu0 %v282
      %v322 = vpop.f32.mrf.mxu0
      %v323 = vadd.f32 0.0, %v322
      %324 = vmatmul.f32.gmra.mxu0 %v285
      %v325 = vpop.f32.mrf.mxu0
      %v326 = vadd.f32 0.0, %v325
      %327 = vdwg.mxu0
      %v328 = vld [vmem:[%s2] sm:$0xff]
      %v329 = vld [vmem:[%s2 + $0x8] sm:$0xff]
      %v330 = vld [vmem:[%s2 + $0x10] sm:$0xff]
      %v331 = vld [vmem:[%s2 + $0x18] sm:$0xff]
      %v332 = vld [vmem:[%s2 + $0x20] sm:$0xf]
      %v334 = vsel %vm262, %v328, 0
      %v337 = vsel %vm262, %v329, 0
      %v340 = vsel %vm262, %v330, 0
      %v343 = vsel %vm262, %v331, 0
      %v346 = vsel %vm262, %v332, 0
      %348 = vmatpush.msra.mxu0 0.0
      %349 = vmatpush.msra.mxu0 0.0
      %350 = vmatpush.msra.mxu0 0.0
      %351 = vmatpush.msra.mxu0 0.0
      %352 = vmatpush.msra.mxu0 0.0
      %353 = vmatpush.msra.mxu0 0.0
      %354 = vmatpush.msra.mxu0 0.0
      %355 = vmatpush.msra.mxu0 0.0
      %356 = vmatpush.msra.mxu0 0.0
      %357 = vmatpush.msra.mxu0 0.0
      %358 = vmatpush.msra.mxu0 0.0
      %359 = vmatpush.msra.mxu0 0.0
      %360 = vmatpush.msra.mxu0 0.0
      %361 = vmatpush.msra.mxu0 0.0
      %362 = vmatpush.msra.mxu0 %v308
      %363 = vmatpush.msra.mxu0 %v305
      %364 = vmatmul.f32.gmra.mxu0 %v334
      %v365 = vpop.f32.mrf.mxu0
      %v366 = vadd.f32 0.0, %v365
      %367 = vmatmul.f32.gmra.mxu0 %v337
      %v368 = vpop.f32.mrf.mxu0
      %v369 = vadd.f32 0.0, %v368
      %370 = vmatmul.f32.gmra.mxu0 %v340
      %v371 = vpop.f32.mrf.mxu0
      %v372 = vadd.f32 0.0, %v371
      %373 = vmatmul.f32.gmra.mxu0 %v343
      %v374 = vpop.f32.mrf.mxu0
      %v375 = vadd.f32 0.0, %v374
      %376 = vmatmul.f32.gmra.mxu0 %v346
      %v377 = vpop.f32.mrf.mxu0
      %v378 = vadd.f32 0.0, %v377
      %379 = vdwg.mxu0
      %380 = vmatpush.msra.mxu0 0.0
      %381 = vmatpush.msra.mxu0 0.0
      %382 = vmatpush.msra.mxu0 0.0
      %383 = vmatpush.msra.mxu0 0.0
      %384 = vmatpush.msra.mxu0 0.0
      %385 = vmatpush.msra.mxu0 0.0
      %386 = vmatpush.msra.mxu0 0.0
      %387 = vmatpush.msra.mxu0 0.0
      %388 = vmatpush.msra.mxu0 0.0
      %389 = vmatpush.msra.mxu0 0.0
      %390 = vmatpush.msra.mxu0 0.0
      %391 = vmatpush.msra.mxu0 0.0
      %392 = vmatpush.msra.mxu0 0.0
      %393 = vmatpush.msra.mxu0 0.0
      %394 = vmatpush.msra.mxu0 %v314
      %395 = vmatpush.msra.mxu0 %v311
      %396 = vmatmul.f32.gmra.mxu0 %v334
      %v397 = vpop.f32.mrf.mxu0
      %v398 = vadd.f32 0.0, %v397
      %399 = vmatmul.f32.gmra.mxu0 %v337
      %v400 = vpop.f32.mrf.mxu0
      %v401 = vadd.f32 0.0, %v400
      %402 = vmatmul.f32.gmra.mxu0 %v340
      %v403 = vpop.f32.mrf.mxu0
      %v404 = vadd.f32 0.0, %v403
      %405 = vmatmul.f32.gmra.mxu0 %v343
      %v406 = vpop.f32.mrf.mxu0
      %v407 = vadd.f32 0.0, %v406
      %408 = vmatmul.f32.gmra.mxu0 %v346
      %v409 = vpop.f32.mrf.mxu0
      %v410 = vadd.f32 0.0, %v409
      %411 = vdwg.mxu0
      %412 = vmatpush.msra.mxu0 0.0
      %413 = vmatpush.msra.mxu0 0.0
      %414 = vmatpush.msra.mxu0 0.0
      %415 = vmatpush.msra.mxu0 0.0
      %416 = vmatpush.msra.mxu0 0.0
      %417 = vmatpush.msra.mxu0 0.0
      %418 = vmatpush.msra.mxu0 0.0
      %419 = vmatpush.msra.mxu0 0.0
      %420 = vmatpush.msra.mxu0 0.0
      %421 = vmatpush.msra.mxu0 0.0
      %422 = vmatpush.msra.mxu0 0.0
      %423 = vmatpush.msra.mxu0 0.0
      %424 = vmatpush.msra.mxu0 0.0
      %425 = vmatpush.msra.mxu0 0.0
      %426 = vmatpush.msra.mxu0 %v320
      %427 = vmatpush.msra.mxu0 %v317
      %428 = vmatmul.f32.gmra.mxu0 %v334
      %v429 = vpop.f32.mrf.mxu0
      %v430 = vadd.f32 0.0, %v429
      %431 = vmatmul.f32.gmra.mxu0 %v337
      %v432 = vpop.f32.mrf.mxu0
      %v433 = vadd.f32 0.0, %v432
      %434 = vmatmul.f32.gmra.mxu0 %v340
      %v435 = vpop.f32.mrf.mxu0
      %v436 = vadd.f32 0.0, %v435
      %437 = vmatmul.f32.gmra.mxu0 %v343
      %v438 = vpop.f32.mrf.mxu0
      %v439 = vadd.f32 0.0, %v438
      %440 = vmatmul.f32.gmra.mxu0 %v346
      %v441 = vpop.f32.mrf.mxu0
      %v442 = vadd.f32 0.0, %v441
      %443 = vdwg.mxu0
      %444 = vmatpush.msra.mxu0 0.0
      %445 = vmatpush.msra.mxu0 0.0
      %446 = vmatpush.msra.mxu0 0.0
      %447 = vmatpush.msra.mxu0 0.0
      %448 = vmatpush.msra.mxu0 0.0
      %449 = vmatpush.msra.mxu0 0.0
      %450 = vmatpush.msra.mxu0 0.0
      %451 = vmatpush.msra.mxu0 0.0
      %452 = vmatpush.msra.mxu0 0.0
      %453 = vmatpush.msra.mxu0 0.0
      %454 = vmatpush.msra.mxu0 0.0
      %455 = vmatpush.msra.mxu0 0.0
      %456 = vmatpush.msra.mxu0 0.0
      %457 = vmatpush.msra.mxu0 0.0
      %458 = vmatpush.msra.mxu0 %v326
      %459 = vmatpush.msra.mxu0 %v323
      %460 = vmatmul.f32.gmra.mxu0 %v334
      %v461 = vpop.f32.mrf.mxu0
      %v462 = vadd.f32 0.0, %v461
      %463 = vmatmul.f32.gmra.mxu0 %v337
      %v464 = vpop.f32.mrf.mxu0
      %v465 = vadd.f32 0.0, %v464
      %466 = vmatmul.f32.gmra.mxu0 %v340
      %v467 = vpop.f32.mrf.mxu0
      %v468 = vadd.f32 0.0, %v467
      %469 = vmatmul.f32.gmra.mxu0 %v343
      %v470 = vpop.f32.mrf.mxu0
      %v471 = vadd.f32 0.0, %v470
      %472 = vmatmul.f32.gmra.mxu0 %v346
      %v473 = vpop.f32.mrf.mxu0
      %v474 = vadd.f32 0.0, %v473
      %475 = vdwg.mxu0
      %v476 = vrot.slane %v430, 4
      %vm477 = vcmask 1047556
      %v478 = vsel %vm477, %v476, %v366
      %v479 = vrot.slane %v366, 4
      %v480 = vsel %vm477, %v430, %v479
      %v482 = vunpack.c.l.s4 1983009808
      %v483 = vunpack.c.0.s8 %v482
      %v484 = vperm.slane %v478, %v483
      %v486 = vunpack.c.l.s4 1983009808
      %v487 = vunpack.c.0.s8 %v486
      %v488 = vperm.slane %v480, %v487
      %v489 = vrot.slane %v462, 4
      %v490 = vsel %vm477, %v489, %v398
      %v491 = vrot.slane %v398, 4
      %v492 = vsel %vm477, %v462, %v491
      %v494 = vunpack.c.l.s4 1983009808
      %v495 = vunpack.c.0.s8 %v494
      %v496 = vperm.slane %v490, %v495
      %v498 = vunpack.c.l.s4 1983009808
      %v499 = vunpack.c.0.s8 %v498
      %v500 = vperm.slane %v492, %v499
      %v501 = vrot.slane %v496, 4
      %v502 = vsel %vm477, %v501, %v484
      %v503 = vrot.slane %v484, 4
      %v504 = vsel %vm477, %v496, %v503
      %v506 = vunpack.c.l.s4 1934713408
      %v507 = vunpack.c.0.s8 %v506
      %v508 = vperm.slane %v502, %v507
      %v510 = vunpack.c.l.s4 1934713408
      %v511 = vunpack.c.0.s8 %v510
      %v512 = vperm.slane %v504, %v511
      %v513 = vrot.slane %v500, 4
      %v514 = vsel %vm477, %v513, %v488
      %v515 = vrot.slane %v488, 4
      %v516 = vsel %vm477, %v500, %v515
      %v518 = vunpack.c.l.s4 1934713408
      %v519 = vunpack.c.0.s8 %v518
      %v520 = vperm.slane %v514, %v519
      %v522 = vunpack.c.l.s4 1934713408
      %v523 = vunpack.c.0.s8 %v522
      %v524 = vperm.slane %v516, %v523
      %v525 = vrot.slane %v508, 4
      %v526 = vsel %vm477, 0.0, %v525
      %v527 = vrot.slane %v512, 4
      %v528 = vsel %vm477, 0.0, %v527
      %v529 = vrot.slane %v520, 4
      %v530 = vsel %vm477, 0.0, %v529
      %v531 = vrot.slane %v524, 4
      %v532 = vsel %vm477, 0.0, %v531
      %v533 = vrot.slane %v433, 4
      %v534 = vsel %vm477, %v533, %v369
      %v535 = vrot.slane %v369, 4
      %v536 = vsel %vm477, %v433, %v535
      %v538 = vunpack.c.l.s4 1983009808
      %v539 = vunpack.c.0.s8 %v538
      %v540 = vperm.slane %v534, %v539
      %v542 = vunpack.c.l.s4 1983009808
      %v543 = vunpack.c.0.s8 %v542
      %v544 = vperm.slane %v536, %v543
      %v545 = vrot.slane %v465, 4
      %v546 = vsel %vm477, %v545, %v401
      %v547 = vrot.slane %v401, 4
      %v548 = vsel %vm477, %v465, %v547
      %v550 = vunpack.c.l.s4 1983009808
      %v551 = vunpack.c.0.s8 %v550
      %v552 = vperm.slane %v546, %v551
      %v554 = vunpack.c.l.s4 1983009808
      %v555 = vunpack.c.0.s8 %v554
      %v556 = vperm.slane %v548, %v555
      %v557 = vrot.slane %v552, 4
      %v558 = vsel %vm477, %v557, %v540
      %v559 = vrot.slane %v540, 4
      %v560 = vsel %vm477, %v552, %v559
      %v562 = vunpack.c.l.s4 1934713408
      %v563 = vunpack.c.0.s8 %v562
      %v564 = vperm.slane %v558, %v563
      %v566 = vunpack.c.l.s4 1934713408
      %v567 = vunpack.c.0.s8 %v566
      %v568 = vperm.slane %v560, %v567
      %v569 = vrot.slane %v556, 4
      %v570 = vsel %vm477, %v569, %v544
      %v571 = vrot.slane %v544, 4
      %v572 = vsel %vm477, %v556, %v571
      %v574 = vunpack.c.l.s4 1934713408
      %v575 = vunpack.c.0.s8 %v574
      %v576 = vperm.slane %v570, %v575
      %v578 = vunpack.c.l.s4 1934713408
      %v579 = vunpack.c.0.s8 %v578
      %v580 = vperm.slane %v572, %v579
      %v581 = vrot.slane %v564, 4
      %v582 = vsel %vm477, 0.0, %v581
      %v583 = vrot.slane %v568, 4
      %v584 = vsel %vm477, 0.0, %v583
      %v585 = vrot.slane %v576, 4
      %v586 = vsel %vm477, 0.0, %v585
      %v587 = vrot.slane %v580, 4
      %v588 = vsel %vm477, 0.0, %v587
      %v589 = vrot.slane %v436, 4
      %v590 = vsel %vm477, %v589, %v372
      %v591 = vrot.slane %v372, 4
      %v592 = vsel %vm477, %v436, %v591
      %v594 = vunpack.c.l.s4 1983009808
      %v595 = vunpack.c.0.s8 %v594
      %v596 = vperm.slane %v590, %v595
      %v598 = vunpack.c.l.s4 1983009808
      %v599 = vunpack.c.0.s8 %v598
      %v600 = vperm.slane %v592, %v599
      %v601 = vrot.slane %v468, 4
      %v602 = vsel %vm477, %v601, %v404
      %v603 = vrot.slane %v404, 4
      %v604 = vsel %vm477, %v468, %v603
      %v606 = vunpack.c.l.s4 1983009808
      %v607 = vunpack.c.0.s8 %v606
      %v608 = vperm.slane %v602, %v607
      %v610 = vunpack.c.l.s4 1983009808
      %v611 = vunpack.c.0.s8 %v610
      %v612 = vperm.slane %v604, %v611
      %v613 = vrot.slane %v608, 4
      %v614 = vsel %vm477, %v613, %v596
      %v615 = vrot.slane %v596, 4
      %v616 = vsel %vm477, %v608, %v615
      %v618 = vunpack.c.l.s4 1934713408
      %v619 = vunpack.c.0.s8 %v618
      %v620 = vperm.slane %v614, %v619
      %v622 = vunpack.c.l.s4 1934713408
      %v623 = vunpack.c.0.s8 %v622
      %v624 = vperm.slane %v616, %v623
      %v625 = vrot.slane %v612, 4
      %v626 = vsel %vm477, %v625, %v600
      %v627 = vrot.slane %v600, 4
      %v628 = vsel %vm477, %v612, %v627
      %v630 = vunpack.c.l.s4 1934713408
      %v631 = vunpack.c.0.s8 %v630
      %v632 = vperm.slane %v626, %v631
      %v634 = vunpack.c.l.s4 1934713408
      %v635 = vunpack.c.0.s8 %v634
      %v636 = vperm.slane %v628, %v635
      %v637 = vrot.slane %v620, 4
      %v638 = vsel %vm477, 0.0, %v637
      %v639 = vrot.slane %v624, 4
      %v640 = vsel %vm477, 0.0, %v639
      %v641 = vrot.slane %v632, 4
      %v642 = vsel %vm477, 0.0, %v641
      %v643 = vrot.slane %v636, 4
      %v644 = vsel %vm477, 0.0, %v643
      %v645 = vrot.slane %v439, 4
      %v646 = vsel %vm477, %v645, %v375
      %v647 = vrot.slane %v375, 4
      %v648 = vsel %vm477, %v439, %v647
      %v650 = vunpack.c.l.s4 1983009808
      %v651 = vunpack.c.0.s8 %v650
      %v652 = vperm.slane %v646, %v651
      %v654 = vunpack.c.l.s4 1983009808
      %v655 = vunpack.c.0.s8 %v654
      %v656 = vperm.slane %v648, %v655
      %v657 = vrot.slane %v471, 4
      %v658 = vsel %vm477, %v657, %v407
      %v659 = vrot.slane %v407, 4
      %v660 = vsel %vm477, %v471, %v659
      %v662 = vunpack.c.l.s4 1983009808
      %v663 = vunpack.c.0.s8 %v662
      %v664 = vperm.slane %v658, %v663
      %v666 = vunpack.c.l.s4 1983009808
      %v667 = vunpack.c.0.s8 %v666
      %v668 = vperm.slane %v660, %v667
      %v669 = vrot.slane %v664, 4
      %v670 = vsel %vm477, %v669, %v652
      %v671 = vrot.slane %v652, 4
      %v672 = vsel %vm477, %v664, %v671
      %v674 = vunpack.c.l.s4 1934713408
      %v675 = vunpack.c.0.s8 %v674
      %v676 = vperm.slane %v670, %v675
      %v678 = vunpack.c.l.s4 1934713408
      %v679 = vunpack.c.0.s8 %v678
      %v680 = vperm.slane %v672, %v679
      %v681 = vrot.slane %v668, 4
      %v682 = vsel %vm477, %v681, %v656
      %v683 = vrot.slane %v656, 4
      %v684 = vsel %vm477, %v668, %v683
      %v686 = vunpack.c.l.s4 1934713408
      %v687 = vunpack.c.0.s8 %v686
      %v688 = vperm.slane %v682, %v687
      %v690 = vunpack.c.l.s4 1934713408
      %v691 = vunpack.c.0.s8 %v690
      %v692 = vperm.slane %v684, %v691
      %v693 = vrot.slane %v676, 4
      %v694 = vsel %vm477, 0.0, %v693
      %v695 = vrot.slane %v680, 4
      %v696 = vsel %vm477, 0.0, %v695
      %v697 = vrot.slane %v688, 4
      %v698 = vsel %vm477, 0.0, %v697
      %v699 = vrot.slane %v692, 4
      %v700 = vsel %vm477, 0.0, %v699
      %v701 = vrot.slane %v442, 4
      %v702 = vsel %vm477, %v701, %v378
      %v704 = vunpack.c.l.s4 1983009808
      %v705 = vunpack.c.0.s8 %v704
      %v706 = vperm.slane %v702, %v705
      %v707 = vrot.slane %v474, 4
      %v708 = vsel %vm477, %v707, %v410
      %v710 = vunpack.c.l.s4 1983009808
      %v711 = vunpack.c.0.s8 %v710
      %v712 = vperm.slane %v708, %v711
      %v713 = vrot.slane %v712, 4
      %v714 = vsel %vm477, %v713, %v706
      %v715 = vrot.slane %v706, 4
      %v716 = vsel %vm477, %v712, %v715
      %v718 = vunpack.c.l.s4 1934713408
      %v719 = vunpack.c.0.s8 %v718
      %v720 = vperm.slane %v714, %v719
      %v722 = vunpack.c.l.s4 1934713408
      %v723 = vunpack.c.0.s8 %v722
      %v724 = vperm.slane %v716, %v723
      %v725 = vrot.slane %v720, 4
      %v726 = vsel %vm477, 0.0, %v725
      %v727 = vrot.slane %v724, 4
      %v728 = vsel %vm477, 0.0, %v727
      %730 = vrot.lane.b32.xlu0 %v526, 32
      %v731 = vpop.permute.xlu0 %730
      %734 = vrot.lane.b32.xlu0 %v512, 64
      %v735 = vpop.permute.xlu0 %734
      %738 = vrot.lane.b32.xlu0 %v528, 96
      %v739 = vpop.permute.xlu0 %738
      %742 = vrot.lane.b32.xlu0 %v530, 32
      %v743 = vpop.permute.xlu0 %742
      %746 = vrot.lane.b32.xlu0 %v524, 64
      %v747 = vpop.permute.xlu0 %746
      %750 = vrot.lane.b32.xlu0 %v532, 96
      %v751 = vpop.permute.xlu0 %750
      %754 = vrot.lane.b32.xlu0 %v582, 32
      %v755 = vpop.permute.xlu0 %754
      %758 = vrot.lane.b32.xlu0 %v568, 64
      %v759 = vpop.permute.xlu0 %758
      %762 = vrot.lane.b32.xlu0 %v584, 96
      %v763 = vpop.permute.xlu0 %762
      %766 = vrot.lane.b32.xlu0 %v586, 32
      %v767 = vpop.permute.xlu0 %766
      %770 = vrot.lane.b32.xlu0 %v580, 64
      %v771 = vpop.permute.xlu0 %770
      %774 = vrot.lane.b32.xlu0 %v588, 96
      %v775 = vpop.permute.xlu0 %774
      %778 = vrot.lane.b32.xlu0 %v638, 32
      %v779 = vpop.permute.xlu0 %778
      %782 = vrot.lane.b32.xlu0 %v624, 64
      %v783 = vpop.permute.xlu0 %782
      %786 = vrot.lane.b32.xlu0 %v640, 96
      %v787 = vpop.permute.xlu0 %786
      %790 = vrot.lane.b32.xlu0 %v642, 32
      %v791 = vpop.permute.xlu0 %790
      %794 = vrot.lane.b32.xlu0 %v636, 64
      %v795 = vpop.permute.xlu0 %794
      %798 = vrot.lane.b32.xlu0 %v644, 96
      %v799 = vpop.permute.xlu0 %798
      %802 = vrot.lane.b32.xlu0 %v694, 32
      %v803 = vpop.permute.xlu0 %802
      %806 = vrot.lane.b32.xlu0 %v680, 64
      %v807 = vpop.permute.xlu0 %806
      %810 = vrot.lane.b32.xlu0 %v696, 96
      %v811 = vpop.permute.xlu0 %810
      %814 = vrot.lane.b32.xlu0 %v698, 32
      %v815 = vpop.permute.xlu0 %814
      %818 = vrot.lane.b32.xlu0 %v692, 64
      %v819 = vpop.permute.xlu0 %818
      %822 = vrot.lane.b32.xlu0 %v700, 96
      %v823 = vpop.permute.xlu0 %822
      %826 = vrot.lane.b32.xlu0 %v726, 32
      %v827 = vpop.permute.xlu0 %826
      %830 = vrot.lane.b32.xlu0 %v724, 64
      %v831 = vpop.permute.xlu0 %830
      %834 = vrot.lane.b32.xlu0 %v728, 96
      %v835 = vpop.permute.xlu0 %834
      %vm837 = vcmask 261120
      %v838 = vsel %vm837, %v508, %v731
      %vm839 = vcmask 523264
      %v840 = vsel %vm839, %v838, %v735
      %vm841 = vcmask 785408
      %v842 = vsel %vm841, %v840, %v739
      %v843 = vsel %vm837, %v520, %v743
      %v844 = vsel %vm839, %v843, %v747
      %v845 = vsel %vm841, %v844, %v751
      %v846 = vsel %vm837, %v564, %v755
      %v847 = vsel %vm839, %v846, %v759
      %v848 = vsel %vm841, %v847, %v763
      %v849 = vsel %vm837, %v576, %v767
      %v850 = vsel %vm839, %v849, %v771
      %v851 = vsel %vm841, %v850, %v775
      %v852 = vsel %vm837, %v620, %v779
      %v853 = vsel %vm839, %v852, %v783
      %v854 = vsel %vm841, %v853, %v787
      %v855 = vsel %vm837, %v632, %v791
      %v856 = vsel %vm839, %v855, %v795
      %v857 = vsel %vm841, %v856, %v799
      %v858 = vsel %vm837, %v676, %v803
      %v859 = vsel %vm839, %v858, %v807
      %v860 = vsel %vm841, %v859, %v811
      %v861 = vsel %vm837, %v688, %v815
      %v862 = vsel %vm839, %v861, %v819
      %v863 = vsel %vm841, %v862, %v823
      %v864 = vsel %vm837, %v720, %v827
      %v865 = vsel %vm839, %v864, %v831
      %v866 = vsel %vm841, %v865, %v835
      %867 = vrot.lane.b32.xlu0 %v842, 1
      %v868 = vpop.permute.xlu0 %867
      %869 = vrot.lane.b32.xlu0 %v845, 1
      %v870 = vpop.permute.xlu0 %869
      %871 = vrot.lane.b32.xlu0 %v848, 1
      %v872 = vpop.permute.xlu0 %871
      %873 = vrot.lane.b32.xlu0 %v851, 1
      %v874 = vpop.permute.xlu0 %873
      %875 = vrot.lane.b32.xlu0 %v854, 1
      %v876 = vpop.permute.xlu0 %875
      %877 = vrot.lane.b32.xlu0 %v857, 1
      %v878 = vpop.permute.xlu0 %877
      %879 = vrot.lane.b32.xlu0 %v860, 1
      %v880 = vpop.permute.xlu0 %879
      %881 = vrot.lane.b32.xlu0 %v863, 1
      %v882 = vpop.permute.xlu0 %881
      %883 = vrot.lane.b32.xlu0 %v866, 1
      %v884 = vpop.permute.xlu0 %883
      %v885 = vlaneseq
      %v886 = vand.u32 %v885, 127
      %vm887 = vcmp.lt.s32.totalorder %v886, 1
      %v888 = vsel %vm887, %v882, %v884
      %v889 = vsel %vm887, %v880, %v882
      %v890 = vsel %vm887, %v878, %v880
      %v891 = vsel %vm887, %v876, %v878
      %v892 = vsel %vm887, %v874, %v876
      %v893 = vsel %vm887, %v872, %v874
      %v894 = vsel %vm887, %v870, %v872
      %v895 = vsel %vm887, %v868, %v870
      %v896 = vsel %vm887, %v884, %v868
      %897 = vrot.lane.b32.xlu0 %v842, 127
      %v898 = vpop.permute.xlu0 %897
      %899 = vrot.lane.b32.xlu0 %v845, 127
      %v900 = vpop.permute.xlu0 %899
      %901 = vrot.lane.b32.xlu0 %v848, 127
      %v902 = vpop.permute.xlu0 %901
      %903 = vrot.lane.b32.xlu0 %v851, 127
      %v904 = vpop.permute.xlu0 %903
      %905 = vrot.lane.b32.xlu0 %v854, 127
      %v906 = vpop.permute.xlu0 %905
      %907 = vrot.lane.b32.xlu0 %v857, 127
      %v908 = vpop.permute.xlu0 %907
      %909 = vrot.lane.b32.xlu0 %v860, 127
      %v910 = vpop.permute.xlu0 %909
      %911 = vrot.lane.b32.xlu0 %v863, 127
      %v912 = vpop.permute.xlu0 %911
      %913 = vrot.lane.b32.xlu0 %v866, 127
      %v914 = vpop.permute.xlu0 %913
      %vm915 = vcmp.lt.s32.totalorder %v886, 127
      %v916 = vsel %vm915, %v912, %v914
      %v917 = vsel %vm915, %v910, %v912
      %v918 = vsel %vm915, %v908, %v910
      %v919 = vsel %vm915, %v906, %v908
      %v920 = vsel %vm915, %v904, %v906
      %v921 = vsel %vm915, %v902, %v904
      %v922 = vsel %vm915, %v900, %v902
      %v923 = vsel %vm915, %v898, %v900
      %v924 = vsel %vm915, %v914, %v898
      %v934 = vrot.slane %v896, 4
      %v935 = vrot.slane %v895, 4
      %v936 = vrot.slane %v894, 4
      %v937 = vrot.slane %v893, 4
      %v938 = vrot.slane %v892, 4
      %v939 = vrot.slane %v891, 4
      %v940 = vrot.slane %v890, 4
      %v941 = vrot.slane %v889, 4
      %v942 = vrot.slane %v888, 4
      %943 = vrot.lane.b32.xlu0 %v934, 96
      %v944 = vpop.permute.xlu0 %943
      %945 = vrot.lane.b32.xlu0 %v935, 96
      %v946 = vpop.permute.xlu0 %945
      %947 = vrot.lane.b32.xlu0 %v936, 96
      %v948 = vpop.permute.xlu0 %947
      %949 = vrot.lane.b32.xlu0 %v937, 96
      %v950 = vpop.permute.xlu0 %949
      %951 = vrot.lane.b32.xlu0 %v938, 96
      %v952 = vpop.permute.xlu0 %951
      %953 = vrot.lane.b32.xlu0 %v939, 96
      %v954 = vpop.permute.xlu0 %953
      %955 = vrot.lane.b32.xlu0 %v940, 96
      %v956 = vpop.permute.xlu0 %955
      %957 = vrot.lane.b32.xlu0 %v941, 96
      %v958 = vpop.permute.xlu0 %957
      %959 = vrot.lane.b32.xlu0 %v942, 96
      %v960 = vpop.permute.xlu0 %959
      %v961 = vsel %vm841, %v944, %v946
      %v962 = vsel %vm841, %v946, %v948
      %v963 = vsel %vm841, %v948, %v950
      %v964 = vsel %vm841, %v950, %v952
      %v965 = vsel %vm841, %v952, %v954
      %v966 = vsel %vm841, %v954, %v956
      %v967 = vsel %vm841, %v956, %v958
      %v968 = vsel %vm841, %v958, %v960
      %978 = vrot.lane.b32.xlu0 %v896, 64
      %v979 = vpop.permute.xlu0 %978
      %980 = vrot.lane.b32.xlu0 %v895, 64
      %v981 = vpop.permute.xlu0 %980
      %982 = vrot.lane.b32.xlu0 %v894, 64
      %v983 = vpop.permute.xlu0 %982
      %984 = vrot.lane.b32.xlu0 %v893, 64
      %v985 = vpop.permute.xlu0 %984
      %986 = vrot.lane.b32.xlu0 %v892, 64
      %v987 = vpop.permute.xlu0 %986
      %988 = vrot.lane.b32.xlu0 %v891, 64
      %v989 = vpop.permute.xlu0 %988
      %990 = vrot.lane.b32.xlu0 %v890, 64
      %v991 = vpop.permute.xlu0 %990
      %992 = vrot.lane.b32.xlu0 %v889, 64
      %v993 = vpop.permute.xlu0 %992
      %994 = vrot.lane.b32.xlu0 %v888, 64
      %v995 = vpop.permute.xlu0 %994
      %v996 = vsel %vm839, %v979, %v981
      %v997 = vsel %vm839, %v981, %v983
      %v998 = vsel %vm839, %v983, %v985
      %v999 = vsel %vm839, %v985, %v987
      %v1000 = vsel %vm839, %v987, %v989
      %v1001 = vsel %vm839, %v989, %v991
      %v1002 = vsel %vm839, %v991, %v993
      %v1003 = vsel %vm839, %v993, %v995
      %vm1004 = vcmask 1043456
      %v1005 = vsel %vm1004, %v896, %v961
      %v1006 = vsel %vm1004, %v895, %v962
      %v1007 = vsel %vm1004, %v894, %v963
      %v1008 = vsel %vm1004, %v893, %v964
      %v1009 = vsel %vm1004, %v892, %v965
      %v1010 = vsel %vm1004, %v891, %v966
      %v1011 = vsel %vm1004, %v890, %v967
      %v1012 = vsel %vm1004, %v889, %v968
      %v1013 = vsel %vm1004, %v888, %v960
      %v1014 = vld [vmem:[%s3] sm:$0xff]
      %1024 = vrot.lane.b32.xlu0 %v1005, 96
      %v1025 = vpop.permute.xlu0 %1024
      %1026 = vrot.lane.b32.xlu0 %v1006, 96
      %v1027 = vpop.permute.xlu0 %1026
      %1028 = vrot.lane.b32.xlu0 %v1007, 96
      %v1029 = vpop.permute.xlu0 %1028
      %1030 = vrot.lane.b32.xlu0 %v1008, 96
      %v1031 = vpop.permute.xlu0 %1030
      %1032 = vrot.lane.b32.xlu0 %v1009, 96
      %v1033 = vpop.permute.xlu0 %1032
      %1034 = vrot.lane.b32.xlu0 %v1010, 96
      %v1035 = vpop.permute.xlu0 %1034
      %1036 = vrot.lane.b32.xlu0 %v1011, 96
      %v1037 = vpop.permute.xlu0 %1036
      %1038 = vrot.lane.b32.xlu0 %v1012, 96
      %v1039 = vpop.permute.xlu0 %1038
      %1040 = vrot.lane.b32.xlu0 %v1013, 96
      %v1041 = vpop.permute.xlu0 %1040
      %1042 = vrot.lane.b32.xlu0 %v996, 96
      %v1043 = vpop.permute.xlu0 %1042
      %1044 = vrot.lane.b32.xlu0 %v997, 96
      %v1045 = vpop.permute.xlu0 %1044
      %1046 = vrot.lane.b32.xlu0 %v998, 96
      %v1047 = vpop.permute.xlu0 %1046
      %1048 = vrot.lane.b32.xlu0 %v999, 96
      %v1049 = vpop.permute.xlu0 %1048
      %1050 = vrot.lane.b32.xlu0 %v1000, 96
      %v1051 = vpop.permute.xlu0 %1050
      %1052 = vrot.lane.b32.xlu0 %v1001, 96
      %v1053 = vpop.permute.xlu0 %1052
      %1054 = vrot.lane.b32.xlu0 %v1002, 96
      %v1055 = vpop.permute.xlu0 %1054
      %1056 = vrot.lane.b32.xlu0 %v1003, 96
      %v1057 = vpop.permute.xlu0 %1056
      %1058 = vrot.lane.b32.xlu0 %v995, 96
      %v1059 = vpop.permute.xlu0 %1058
      %v1060 = vsel %vm841, %v1025, %v1027
      %v1061 = vsel %vm841, %v1027, %v1029
      %v1062 = vsel %vm841, %v1029, %v1031
      %v1063 = vsel %vm841, %v1031, %v1033
      %v1064 = vsel %vm841, %v1033, %v1035
      %v1065 = vsel %vm841, %v1035, %v1037
      %v1066 = vsel %vm841, %v1037, %v1039
      %v1067 = vsel %vm841, %v1039, %v1041
      %v1068 = vsel %vm841, %v1043, %v1045
      %v1069 = vsel %vm841, %v1045, %v1047
      %v1070 = vsel %vm841, %v1047, %v1049
      %v1071 = vsel %vm841, %v1049, %v1051
      %v1072 = vsel %vm841, %v1051, %v1053
      %v1073 = vsel %vm841, %v1053, %v1055
      %v1074 = vsel %vm841, %v1055, %v1057
      %v1075 = vsel %vm841, %v1057, %v1059
      %vm1084 = vcmask 97280
      %v1086 = vsel %vm1084, %v1014, 0
      %v1088 = vsel %vm1004, %v1068, 0
      %v1090 = vsel %vm1004, %v1069, 0
      %v1092 = vsel %vm1004, %v1070, 0
      %v1094 = vsel %vm1004, %v1071, 0
      %v1096 = vsel %vm1004, %v1072, 0
      %v1098 = vsel %vm1004, %v1073, 0
      %v1100 = vsel %vm1004, %v1074, 0
      %v1102 = vsel %vm1004, %v1075, 0
      %1104 = vmatpush.msra.mxu0 0.0
      %1105 = vmatpush.msra.mxu0 0.0
      %1106 = vmatpush.msra.mxu0 0.0
      %1107 = vmatpush.msra.mxu0 0.0
      %1108 = vmatpush.msra.mxu0 0.0
      %1109 = vmatpush.msra.mxu0 0.0
      %1110 = vmatpush.msra.mxu0 0.0
      %1111 = vmatpush.msra.mxu0 0.0
      %1112 = vmatpush.msra.mxu0 0.0
      %1113 = vmatpush.msra.mxu0 0.0
      %1114 = vmatpush.msra.mxu0 0.0
      %1115 = vmatpush.msra.mxu0 0.0
      %1116 = vmatpush.msra.mxu0 0.0
      %1117 = vmatpush.msra.mxu0 0.0
      %1118 = vmatpush.msra.mxu0 %v1088
      %1119 = vmatpush.msra.mxu0 %v1060
      %1120 = vmatmul.f32.gmra.mxu0 %v1086
      %v1121 = vpop.f32.mrf.mxu0
      %v1122 = vadd.f32 0.0, %v1121
      %1123 = vdwg.mxu0
      %1124 = vmatpush.msra.mxu0 0.0
      %1125 = vmatpush.msra.mxu0 0.0
      %1126 = vmatpush.msra.mxu0 0.0
      %1127 = vmatpush.msra.mxu0 0.0
      %1128 = vmatpush.msra.mxu0 0.0
      %1129 = vmatpush.msra.mxu0 0.0
      %1130 = vmatpush.msra.mxu0 0.0
      %1131 = vmatpush.msra.mxu0 0.0
      %1132 = vmatpush.msra.mxu0 0.0
      %1133 = vmatpush.msra.mxu0 0.0
      %1134 = vmatpush.msra.mxu0 0.0
      %1135 = vmatpush.msra.mxu0 0.0
      %1136 = vmatpush.msra.mxu0 0.0
      %1137 = vmatpush.msra.mxu0 0.0
      %1138 = vmatpush.msra.mxu0 %v1090
      %1139 = vmatpush.msra.mxu0 %v1061
      %1140 = vmatmul.f32.gmra.mxu0 %v1086
      %v1141 = vpop.f32.mrf.mxu0
      %v1142 = vadd.f32 0.0, %v1141
      %1143 = vdwg.mxu0
      %1144 = vmatpush.msra.mxu0 0.0
      %1145 = vmatpush.msra.mxu0 0.0
      %1146 = vmatpush.msra.mxu0 0.0
      %1147 = vmatpush.msra.mxu0 0.0
      %1148 = vmatpush.msra.mxu0 0.0
      %1149 = vmatpush.msra.mxu0 0.0
      %1150 = vmatpush.msra.mxu0 0.0
      %1151 = vmatpush.msra.mxu0 0.0
      %1152 = vmatpush.msra.mxu0 0.0
      %1153 = vmatpush.msra.mxu0 0.0
      %1154 = vmatpush.msra.mxu0 0.0
      %1155 = vmatpush.msra.mxu0 0.0
      %1156 = vmatpush.msra.mxu0 0.0
      %1157 = vmatpush.msra.mxu0 0.0
      %1158 = vmatpush.msra.mxu0 %v1092
      %1159 = vmatpush.msra.mxu0 %v1062
      %1160 = vmatmul.f32.gmra.mxu0 %v1086
      %v1161 = vpop.f32.mrf.mxu0
      %v1162 = vadd.f32 0.0, %v1161
      %1163 = vdwg.mxu0
      %1164 = vmatpush.msra.mxu0 0.0
      %1165 = vmatpush.msra.mxu0 0.0
      %1166 = vmatpush.msra.mxu0 0.0
      %1167 = vmatpush.msra.mxu0 0.0
      %1168 = vmatpush.msra.mxu0 0.0
      %1169 = vmatpush.msra.mxu0 0.0
      %1170 = vmatpush.msra.mxu0 0.0
      %1171 = vmatpush.msra.mxu0 0.0
      %1172 = vmatpush.msra.mxu0 0.0
      %1173 = vmatpush.msra.mxu0 0.0
      %1174 = vmatpush.msra.mxu0 0.0
      %1175 = vmatpush.msra.mxu0 0.0
      %1176 = vmatpush.msra.mxu0 0.0
      %1177 = vmatpush.msra.mxu0 0.0
      %1178 = vmatpush.msra.mxu0 %v1094
      %1179 = vmatpush.msra.mxu0 %v1063
      %1180 = vmatmul.f32.gmra.mxu0 %v1086
      %v1181 = vpop.f32.mrf.mxu0
      %v1182 = vadd.f32 0.0, %v1181
      %1183 = vdwg.mxu0
      %1184 = vmatpush.msra.mxu0 0.0
      %1185 = vmatpush.msra.mxu0 0.0
      %1186 = vmatpush.msra.mxu0 0.0
      %1187 = vmatpush.msra.mxu0 0.0
      %1188 = vmatpush.msra.mxu0 0.0
      %1189 = vmatpush.msra.mxu0 0.0
      %1190 = vmatpush.msra.mxu0 0.0
      %1191 = vmatpush.msra.mxu0 0.0
      %1192 = vmatpush.msra.mxu0 0.0
      %1193 = vmatpush.msra.mxu0 0.0
      %1194 = vmatpush.msra.mxu0 0.0
      %1195 = vmatpush.msra.mxu0 0.0
      %1196 = vmatpush.msra.mxu0 0.0
      %1197 = vmatpush.msra.mxu0 0.0
      %1198 = vmatpush.msra.mxu0 %v1096
      %1199 = vmatpush.msra.mxu0 %v1064
      %1200 = vmatmul.f32.gmra.mxu0 %v1086
      %v1201 = vpop.f32.mrf.mxu0
      %v1202 = vadd.f32 0.0, %v1201
      %1203 = vdwg.mxu0
      %1204 = vmatpush.msra.mxu0 0.0
      %1205 = vmatpush.msra.mxu0 0.0
      %1206 = vmatpush.msra.mxu0 0.0
      %1207 = vmatpush.msra.mxu0 0.0
      %1208 = vmatpush.msra.mxu0 0.0
      %1209 = vmatpush.msra.mxu0 0.0
      %1210 = vmatpush.msra.mxu0 0.0
      %1211 = vmatpush.msra.mxu0 0.0
      %1212 = vmatpush.msra.mxu0 0.0
      %1213 = vmatpush.msra.mxu0 0.0
      %1214 = vmatpush.msra.mxu0 0.0
      %1215 = vmatpush.msra.mxu0 0.0
      %1216 = vmatpush.msra.mxu0 0.0
      %1217 = vmatpush.msra.mxu0 0.0
      %1218 = vmatpush.msra.mxu0 %v1098
      %1219 = vmatpush.msra.mxu0 %v1065
      %1220 = vmatmul.f32.gmra.mxu0 %v1086
      %v1221 = vpop.f32.mrf.mxu0
      %v1222 = vadd.f32 0.0, %v1221
      %1223 = vdwg.mxu0
      %1224 = vmatpush.msra.mxu0 0.0
      %1225 = vmatpush.msra.mxu0 0.0
      %1226 = vmatpush.msra.mxu0 0.0
      %1227 = vmatpush.msra.mxu0 0.0
      %1228 = vmatpush.msra.mxu0 0.0
      %1229 = vmatpush.msra.mxu0 0.0
      %1230 = vmatpush.msra.mxu0 0.0
      %1231 = vmatpush.msra.mxu0 0.0
      %1232 = vmatpush.msra.mxu0 0.0
      %1233 = vmatpush.msra.mxu0 0.0
      %1234 = vmatpush.msra.mxu0 0.0
      %1235 = vmatpush.msra.mxu0 0.0
      %1236 = vmatpush.msra.mxu0 0.0
      %1237 = vmatpush.msra.mxu0 0.0
      %1238 = vmatpush.msra.mxu0 %v1100
      %1239 = vmatpush.msra.mxu0 %v1066
      %1240 = vmatmul.f32.gmra.mxu0 %v1086
      %v1241 = vpop.f32.mrf.mxu0
      %v1242 = vadd.f32 0.0, %v1241
      %1243 = vdwg.mxu0
      %1244 = vmatpush.msra.mxu0 0.0
      %1245 = vmatpush.msra.mxu0 0.0
      %1246 = vmatpush.msra.mxu0 0.0
      %1247 = vmatpush.msra.mxu0 0.0
      %1248 = vmatpush.msra.mxu0 0.0
      %1249 = vmatpush.msra.mxu0 0.0
      %1250 = vmatpush.msra.mxu0 0.0
      %1251 = vmatpush.msra.mxu0 0.0
      %1252 = vmatpush.msra.mxu0 0.0
      %1253 = vmatpush.msra.mxu0 0.0
      %1254 = vmatpush.msra.mxu0 0.0
      %1255 = vmatpush.msra.mxu0 0.0
      %1256 = vmatpush.msra.mxu0 0.0
      %1257 = vmatpush.msra.mxu0 0.0
      %1258 = vmatpush.msra.mxu0 %v1102
      %1259 = vmatpush.msra.mxu0 %v1067
      %1260 = vmatmul.f32.gmra.mxu0 %v1086
      %v1261 = vpop.f32.mrf.mxu0
      %v1262 = vadd.f32 0.0, %v1261
      %1263 = vdwg.mxu0
      %v1264 = vld [vmem:[%s4] ss:$2 sm:$0xff]
      %v1266 = vperm.slane %v1264, 0
      %v1267 = vperm.slane %v1264, 1
      %v1268 = vperm.slane %v1264, 2
      %v1269 = vperm.slane %v1264, 3
      %v1270 = vperm.slane %v1264, 4
      %v1271 = vperm.slane %v1264, 5
      %v1272 = vperm.slane %v1264, 6
      %v1273 = vperm.slane %v1264, 7
      %v1282 = vmul.f32 %v1122, %v1266
      %v1283 = vmul.f32 %v1142, %v1267
      %v1284 = vmul.f32 %v1162, %v1268
      %v1285 = vmul.f32 %v1182, %v1269
      %v1286 = vmul.f32 %v1202, %v1270
      %v1287 = vmul.f32 %v1222, %v1271
      %v1288 = vmul.f32 %v1242, %v1272
      %v1289 = vmul.f32 %v1262, %v1273
      %v1290 = vadd.f32 %v1282, 0.0
      %v1291 = vadd.f32 %v1283, 0.0
      %v1292 = vadd.f32 %v1284, 0.0
      %v1293 = vadd.f32 %v1285, 0.0
      %v1294 = vadd.f32 %v1286, 0.0
      %v1295 = vadd.f32 %v1287, 0.0
      %v1296 = vadd.f32 %v1288, 0.0
      %v1297 = vadd.f32 %v1289, 0.0
      %v1307 = vrot.slane %v842, 4
      %v1308 = vrot.slane %v845, 4
      %v1309 = vrot.slane %v848, 4
      %v1310 = vrot.slane %v851, 4
      %v1311 = vrot.slane %v854, 4
      %v1312 = vrot.slane %v857, 4
      %v1313 = vrot.slane %v860, 4
      %v1314 = vrot.slane %v863, 4
      %v1315 = vrot.slane %v866, 4
      %1316 = vrot.lane.b32.xlu0 %v1307, 96
      %v1317 = vpop.permute.xlu0 %1316
      %1318 = vrot.lane.b32.xlu0 %v1308, 96
      %v1319 = vpop.permute.xlu0 %1318
      %1320 = vrot.lane.b32.xlu0 %v1309, 96
      %v1321 = vpop.permute.xlu0 %1320
      %1322 = vrot.lane.b32.xlu0 %v1310, 96
      %v1323 = vpop.permute.xlu0 %1322
      %1324 = vrot.lane.b32.xlu0 %v1311, 96
      %v1325 = vpop.permute.xlu0 %1324
      %1326 = vrot.lane.b32.xlu0 %v1312, 96
      %v1327 = vpop.permute.xlu0 %1326
      %1328 = vrot.lane.b32.xlu0 %v1313, 96
      %v1329 = vpop.permute.xlu0 %1328
      %1330 = vrot.lane.b32.xlu0 %v1314, 96
      %v1331 = vpop.permute.xlu0 %1330
      %1332 = vrot.lane.b32.xlu0 %v1315, 96
      %v1333 = vpop.permute.xlu0 %1332
      %v1334 = vsel %vm841, %v1317, %v1319
      %v1335 = vsel %vm841, %v1319, %v1321
      %v1336 = vsel %vm841, %v1321, %v1323
      %v1337 = vsel %vm841, %v1323, %v1325
      %v1338 = vsel %vm841, %v1325, %v1327
      %v1339 = vsel %vm841, %v1327, %v1329
      %v1340 = vsel %vm841, %v1329, %v1331
      %v1341 = vsel %vm841, %v1331, %v1333
      %1351 = vrot.lane.b32.xlu0 %v842, 64
      %v1352 = vpop.permute.xlu0 %1351
      %1353 = vrot.lane.b32.xlu0 %v845, 64
      %v1354 = vpop.permute.xlu0 %1353
      %1355 = vrot.lane.b32.xlu0 %v848, 64
      %v1356 = vpop.permute.xlu0 %1355
      %1357 = vrot.lane.b32.xlu0 %v851, 64
      %v1358 = vpop.permute.xlu0 %1357
      %1359 = vrot.lane.b32.xlu0 %v854, 64
      %v1360 = vpop.permute.xlu0 %1359
      %1361 = vrot.lane.b32.xlu0 %v857, 64
      %v1362 = vpop.permute.xlu0 %1361
      %1363 = vrot.lane.b32.xlu0 %v860, 64
      %v1364 = vpop.permute.xlu0 %1363
      %1365 = vrot.lane.b32.xlu0 %v863, 64
      %v1366 = vpop.permute.xlu0 %1365
      %1367 = vrot.lane.b32.xlu0 %v866, 64
      %v1368 = vpop.permute.xlu0 %1367
      %v1369 = vsel %vm839, %v1352, %v1354
      %v1370 = vsel %vm839, %v1354, %v1356
      %v1371 = vsel %vm839, %v1356, %v1358
      %v1372 = vsel %vm839, %v1358, %v1360
      %v1373 = vsel %vm839, %v1360, %v1362
      %v1374 = vsel %vm839, %v1362, %v1364
      %v1375 = vsel %vm839, %v1364, %v1366
      %v1376 = vsel %vm839, %v1366, %v1368
      %v1377 = vsel %vm1004, %v842, %v1334
      %v1378 = vsel %vm1004, %v845, %v1335
      %v1379 = vsel %vm1004, %v848, %v1336
      %v1380 = vsel %vm1004, %v851, %v1337
      %v1381 = vsel %vm1004, %v854, %v1338
      %v1382 = vsel %vm1004, %v857, %v1339
      %v1383 = vsel %vm1004, %v860, %v1340
      %v1384 = vsel %vm1004, %v863, %v1341
      %v1385 = vsel %vm1004, %v866, %v1333
      %s1386 = scalar_lea.vmem %s3, 8
      %v1387 = vld [vmem:[%s1386] sm:$0xff]
      %1397 = vrot.lane.b32.xlu0 %v1377, 96
      %v1398 = vpop.permute.xlu0 %1397
      %1399 = vrot.lane.b32.xlu0 %v1378, 96
      %v1400 = vpop.permute.xlu0 %1399
      %1401 = vrot.lane.b32.xlu0 %v1379, 96
      %v1402 = vpop.permute.xlu0 %1401
      %1403 = vrot.lane.b32.xlu0 %v1380, 96
      %v1404 = vpop.permute.xlu0 %1403
      %1405 = vrot.lane.b32.xlu0 %v1381, 96
      %v1406 = vpop.permute.xlu0 %1405
      %1407 = vrot.lane.b32.xlu0 %v1382, 96
      %v1408 = vpop.permute.xlu0 %1407
      %1409 = vrot.lane.b32.xlu0 %v1383, 96
      %v1410 = vpop.permute.xlu0 %1409
      %1411 = vrot.lane.b32.xlu0 %v1384, 96
      %v1412 = vpop.permute.xlu0 %1411
      %1413 = vrot.lane.b32.xlu0 %v1385, 96
      %v1414 = vpop.permute.xlu0 %1413
      %1415 = vrot.lane.b32.xlu0 %v1369, 96
      %v1416 = vpop.permute.xlu0 %1415
      %1417 = vrot.lane.b32.xlu0 %v1370, 96
      %v1418 = vpop.permute.xlu0 %1417
      %1419 = vrot.lane.b32.xlu0 %v1371, 96
      %v1420 = vpop.permute.xlu0 %1419
      %1421 = vrot.lane.b32.xlu0 %v1372, 96
      %v1422 = vpop.permute.xlu0 %1421
      %1423 = vrot.lane.b32.xlu0 %v1373, 96
      %v1424 = vpop.permute.xlu0 %1423
      %1425 = vrot.lane.b32.xlu0 %v1374, 96
      %v1426 = vpop.permute.xlu0 %1425
      %1427 = vrot.lane.b32.xlu0 %v1375, 96
      %v1428 = vpop.permute.xlu0 %1427
      %1429 = vrot.lane.b32.xlu0 %v1376, 96
      %v1430 = vpop.permute.xlu0 %1429
      %1431 = vrot.lane.b32.xlu0 %v1368, 96
      %v1432 = vpop.permute.xlu0 %1431
      %v1433 = vsel %vm841, %v1398, %v1400
      %v1434 = vsel %vm841, %v1400, %v1402
      %v1435 = vsel %vm841, %v1402, %v1404
      %v1436 = vsel %vm841, %v1404, %v1406
      %v1437 = vsel %vm841, %v1406, %v1408
      %v1438 = vsel %vm841, %v1408, %v1410
      %v1439 = vsel %vm841, %v1410, %v1412
      %v1440 = vsel %vm841, %v1412, %v1414
      %v1441 = vsel %vm841, %v1416, %v1418
      %v1442 = vsel %vm841, %v1418, %v1420
      %v1443 = vsel %vm841, %v1420, %v1422
      %v1444 = vsel %vm841, %v1422, %v1424
      %v1445 = vsel %vm841, %v1424, %v1426
      %v1446 = vsel %vm841, %v1426, %v1428
      %v1447 = vsel %vm841, %v1428, %v1430
      %v1448 = vsel %vm841, %v1430, %v1432
      %v1458 = vsel %vm1084, %v1387, 0
      %v1460 = vsel %vm1004, %v1441, 0
      %v1462 = vsel %vm1004, %v1442, 0
      %v1464 = vsel %vm1004, %v1443, 0
      %v1466 = vsel %vm1004, %v1444, 0
      %v1468 = vsel %vm1004, %v1445, 0
      %v1470 = vsel %vm1004, %v1446, 0
      %v1472 = vsel %vm1004, %v1447, 0
      %v1474 = vsel %vm1004, %v1448, 0
      %1476 = vmatpush.msra.mxu0 0.0
      %1477 = vmatpush.msra.mxu0 0.0
      %1478 = vmatpush.msra.mxu0 0.0
      %1479 = vmatpush.msra.mxu0 0.0
      %1480 = vmatpush.msra.mxu0 0.0
      %1481 = vmatpush.msra.mxu0 0.0
      %1482 = vmatpush.msra.mxu0 0.0
      %1483 = vmatpush.msra.mxu0 0.0
      %1484 = vmatpush.msra.mxu0 0.0
      %1485 = vmatpush.msra.mxu0 0.0
      %1486 = vmatpush.msra.mxu0 0.0
      %1487 = vmatpush.msra.mxu0 0.0
      %1488 = vmatpush.msra.mxu0 0.0
      %1489 = vmatpush.msra.mxu0 0.0
      %1490 = vmatpush.msra.mxu0 %v1460
      %1491 = vmatpush.msra.mxu0 %v1433
      %1492 = vmatmul.f32.gmra.mxu0 %v1458
      %v1493 = vpop.f32.mrf.mxu0
      %v1494 = vadd.f32 0.0, %v1493
      %1495 = vdwg.mxu0
      %1496 = vmatpush.msra.mxu0 0.0
      %1497 = vmatpush.msra.mxu0 0.0
      %1498 = vmatpush.msra.mxu0 0.0
      %1499 = vmatpush.msra.mxu0 0.0
      %1500 = vmatpush.msra.mxu0 0.0
      %1501 = vmatpush.msra.mxu0 0.0
      %1502 = vmatpush.msra.mxu0 0.0
      %1503 = vmatpush.msra.mxu0 0.0
      %1504 = vmatpush.msra.mxu0 0.0
      %1505 = vmatpush.msra.mxu0 0.0
      %1506 = vmatpush.msra.mxu0 0.0
      %1507 = vmatpush.msra.mxu0 0.0
      %1508 = vmatpush.msra.mxu0 0.0
      %1509 = vmatpush.msra.mxu0 0.0
      %1510 = vmatpush.msra.mxu0 %v1462
      %1511 = vmatpush.msra.mxu0 %v1434
      %1512 = vmatmul.f32.gmra.mxu0 %v1458
      %v1513 = vpop.f32.mrf.mxu0
      %v1514 = vadd.f32 0.0, %v1513
      %1515 = vdwg.mxu0
      %1516 = vmatpush.msra.mxu0 0.0
      %1517 = vmatpush.msra.mxu0 0.0
      %1518 = vmatpush.msra.mxu0 0.0
      %1519 = vmatpush.msra.mxu0 0.0
      %1520 = vmatpush.msra.mxu0 0.0
      %1521 = vmatpush.msra.mxu0 0.0
      %1522 = vmatpush.msra.mxu0 0.0
      %1523 = vmatpush.msra.mxu0 0.0
      %1524 = vmatpush.msra.mxu0 0.0
      %1525 = vmatpush.msra.mxu0 0.0
      %1526 = vmatpush.msra.mxu0 0.0
      %1527 = vmatpush.msra.mxu0 0.0
      %1528 = vmatpush.msra.mxu0 0.0
      %1529 = vmatpush.msra.mxu0 0.0
      %1530 = vmatpush.msra.mxu0 %v1464
      %1531 = vmatpush.msra.mxu0 %v1435
      %1532 = vmatmul.f32.gmra.mxu0 %v1458
      %v1533 = vpop.f32.mrf.mxu0
      %v1534 = vadd.f32 0.0, %v1533
      %1535 = vdwg.mxu0
      %1536 = vmatpush.msra.mxu0 0.0
      %1537 = vmatpush.msra.mxu0 0.0
      %1538 = vmatpush.msra.mxu0 0.0
      %1539 = vmatpush.msra.mxu0 0.0
      %1540 = vmatpush.msra.mxu0 0.0
      %1541 = vmatpush.msra.mxu0 0.0
      %1542 = vmatpush.msra.mxu0 0.0
      %1543 = vmatpush.msra.mxu0 0.0
      %1544 = vmatpush.msra.mxu0 0.0
      %1545 = vmatpush.msra.mxu0 0.0
      %1546 = vmatpush.msra.mxu0 0.0
      %1547 = vmatpush.msra.mxu0 0.0
      %1548 = vmatpush.msra.mxu0 0.0
      %1549 = vmatpush.msra.mxu0 0.0
      %1550 = vmatpush.msra.mxu0 %v1466
      %1551 = vmatpush.msra.mxu0 %v1436
      %1552 = vmatmul.f32.gmra.mxu0 %v1458
      %v1553 = vpop.f32.mrf.mxu0
      %v1554 = vadd.f32 0.0, %v1553
      %1555 = vdwg.mxu0
      %1556 = vmatpush.msra.mxu0 0.0
      %1557 = vmatpush.msra.mxu0 0.0
      %1558 = vmatpush.msra.mxu0 0.0
      %1559 = vmatpush.msra.mxu0 0.0
      %1560 = vmatpush.msra.mxu0 0.0
      %1561 = vmatpush.msra.mxu0 0.0
      %1562 = vmatpush.msra.mxu0 0.0
      %1563 = vmatpush.msra.mxu0 0.0
      %1564 = vmatpush.msra.mxu0 0.0
      %1565 = vmatpush.msra.mxu0 0.0
      %1566 = vmatpush.msra.mxu0 0.0
      %1567 = vmatpush.msra.mxu0 0.0
      %1568 = vmatpush.msra.mxu0 0.0
      %1569 = vmatpush.msra.mxu0 0.0
      %1570 = vmatpush.msra.mxu0 %v1468
      %1571 = vmatpush.msra.mxu0 %v1437
      %1572 = vmatmul.f32.gmra.mxu0 %v1458
      %v1573 = vpop.f32.mrf.mxu0
      %v1574 = vadd.f32 0.0, %v1573
      %1575 = vdwg.mxu0
      %1576 = vmatpush.msra.mxu0 0.0
      %1577 = vmatpush.msra.mxu0 0.0
      %1578 = vmatpush.msra.mxu0 0.0
      %1579 = vmatpush.msra.mxu0 0.0
      %1580 = vmatpush.msra.mxu0 0.0
      %1581 = vmatpush.msra.mxu0 0.0
      %1582 = vmatpush.msra.mxu0 0.0
      %1583 = vmatpush.msra.mxu0 0.0
      %1584 = vmatpush.msra.mxu0 0.0
      %1585 = vmatpush.msra.mxu0 0.0
      %1586 = vmatpush.msra.mxu0 0.0
      %1587 = vmatpush.msra.mxu0 0.0
      %1588 = vmatpush.msra.mxu0 0.0
      %1589 = vmatpush.msra.mxu0 0.0
      %1590 = vmatpush.msra.mxu0 %v1470
      %1591 = vmatpush.msra.mxu0 %v1438
      %1592 = vmatmul.f32.gmra.mxu0 %v1458
      %v1593 = vpop.f32.mrf.mxu0
      %v1594 = vadd.f32 0.0, %v1593
      %1595 = vdwg.mxu0
      %1596 = vmatpush.msra.mxu0 0.0
      %1597 = vmatpush.msra.mxu0 0.0
      %1598 = vmatpush.msra.mxu0 0.0
      %1599 = vmatpush.msra.mxu0 0.0
      %1600 = vmatpush.msra.mxu0 0.0
      %1601 = vmatpush.msra.mxu0 0.0
      %1602 = vmatpush.msra.mxu0 0.0
      %1603 = vmatpush.msra.mxu0 0.0
      %1604 = vmatpush.msra.mxu0 0.0
      %1605 = vmatpush.msra.mxu0 0.0
      %1606 = vmatpush.msra.mxu0 0.0
      %1607 = vmatpush.msra.mxu0 0.0
      %1608 = vmatpush.msra.mxu0 0.0
      %1609 = vmatpush.msra.mxu0 0.0
      %1610 = vmatpush.msra.mxu0 %v1472
      %1611 = vmatpush.msra.mxu0 %v1439
      %1612 = vmatmul.f32.gmra.mxu0 %v1458
      %v1613 = vpop.f32.mrf.mxu0
      %v1614 = vadd.f32 0.0, %v1613
      %1615 = vdwg.mxu0
      %1616 = vmatpush.msra.mxu0 0.0
      %1617 = vmatpush.msra.mxu0 0.0
      %1618 = vmatpush.msra.mxu0 0.0
      %1619 = vmatpush.msra.mxu0 0.0
      %1620 = vmatpush.msra.mxu0 0.0
      %1621 = vmatpush.msra.mxu0 0.0
      %1622 = vmatpush.msra.mxu0 0.0
      %1623 = vmatpush.msra.mxu0 0.0
      %1624 = vmatpush.msra.mxu0 0.0
      %1625 = vmatpush.msra.mxu0 0.0
      %1626 = vmatpush.msra.mxu0 0.0
      %1627 = vmatpush.msra.mxu0 0.0
      %1628 = vmatpush.msra.mxu0 0.0
      %1629 = vmatpush.msra.mxu0 0.0
      %1630 = vmatpush.msra.mxu0 %v1474
      %1631 = vmatpush.msra.mxu0 %v1440
      %1632 = vmatmul.f32.gmra.mxu0 %v1458
      %v1633 = vpop.f32.mrf.mxu0
      %v1634 = vadd.f32 0.0, %v1633
      %1635 = vdwg.mxu0
      %v1636 = vadd.f32 %v1290, %v1494
      %v1637 = vadd.f32 %v1291, %v1514
      %v1638 = vadd.f32 %v1292, %v1534
      %v1639 = vadd.f32 %v1293, %v1554
      %v1640 = vadd.f32 %v1294, %v1574
      %v1641 = vadd.f32 %v1295, %v1594
      %v1642 = vadd.f32 %v1296, %v1614
      %v1643 = vadd.f32 %v1297, %v1634
      %v1653 = vrot.slane %v923, 4
      %v1654 = vrot.slane %v922, 4
      %v1655 = vrot.slane %v921, 4
      %v1656 = vrot.slane %v920, 4
      %v1657 = vrot.slane %v919, 4
      %v1658 = vrot.slane %v918, 4
      %v1659 = vrot.slane %v917, 4
      %v1660 = vrot.slane %v916, 4
      %v1661 = vrot.slane %v924, 4
      %1662 = vrot.lane.b32.xlu0 %v1653, 96
      %v1663 = vpop.permute.xlu0 %1662
      %1664 = vrot.lane.b32.xlu0 %v1654, 96
      %v1665 = vpop.permute.xlu0 %1664
      %1666 = vrot.lane.b32.xlu0 %v1655, 96
      %v1667 = vpop.permute.xlu0 %1666
      %1668 = vrot.lane.b32.xlu0 %v1656, 96
      %v1669 = vpop.permute.xlu0 %1668
      %1670 = vrot.lane.b32.xlu0 %v1657, 96
      %v1671 = vpop.permute.xlu0 %1670
      %1672 = vrot.lane.b32.xlu0 %v1658, 96
      %v1673 = vpop.permute.xlu0 %1672
      %1674 = vrot.lane.b32.xlu0 %v1659, 96
      %v1675 = vpop.permute.xlu0 %1674
      %1676 = vrot.lane.b32.xlu0 %v1660, 96
      %v1677 = vpop.permute.xlu0 %1676
      %1678 = vrot.lane.b32.xlu0 %v1661, 96
      %v1679 = vpop.permute.xlu0 %1678
      %v1680 = vsel %vm841, %v1663, %v1665
      %v1681 = vsel %vm841, %v1665, %v1667
      %v1682 = vsel %vm841, %v1667, %v1669
      %v1683 = vsel %vm841, %v1669, %v1671
      %v1684 = vsel %vm841, %v1671, %v1673
      %v1685 = vsel %vm841, %v1673, %v1675
      %v1686 = vsel %vm841, %v1675, %v1677
      %v1687 = vsel %vm841, %v1677, %v1679
      %1697 = vrot.lane.b32.xlu0 %v923, 64
      %v1698 = vpop.permute.xlu0 %1697
      %1699 = vrot.lane.b32.xlu0 %v922, 64
      %v1700 = vpop.permute.xlu0 %1699
      %1701 = vrot.lane.b32.xlu0 %v921, 64
      %v1702 = vpop.permute.xlu0 %1701
      %1703 = vrot.lane.b32.xlu0 %v920, 64
      %v1704 = vpop.permute.xlu0 %1703
      %1705 = vrot.lane.b32.xlu0 %v919, 64
      %v1706 = vpop.permute.xlu0 %1705
      %1707 = vrot.lane.b32.xlu0 %v918, 64
      %v1708 = vpop.permute.xlu0 %1707
      %1709 = vrot.lane.b32.xlu0 %v917, 64
      %v1710 = vpop.permute.xlu0 %1709
      %1711 = vrot.lane.b32.xlu0 %v916, 64
      %v1712 = vpop.permute.xlu0 %1711
      %1713 = vrot.lane.b32.xlu0 %v924, 64
      %v1714 = vpop.permute.xlu0 %1713
      %v1715 = vsel %vm839, %v1698, %v1700
      %v1716 = vsel %vm839, %v1700, %v1702
      %v1717 = vsel %vm839, %v1702, %v1704
      %v1718 = vsel %vm839, %v1704, %v1706
      %v1719 = vsel %vm839, %v1706, %v1708
      %v1720 = vsel %vm839, %v1708, %v1710
      %v1721 = vsel %vm839, %v1710, %v1712
      %v1722 = vsel %vm839, %v1712, %v1714
      %v1723 = vsel %vm1004, %v923, %v1680
      %v1724 = vsel %vm1004, %v922, %v1681
      %v1725 = vsel %vm1004, %v921, %v1682
      %v1726 = vsel %vm1004, %v920, %v1683
      %v1727 = vsel %vm1004, %v919, %v1684
      %v1728 = vsel %vm1004, %v918, %v1685
      %v1729 = vsel %vm1004, %v917, %v1686
      %v1730 = vsel %vm1004, %v916, %v1687
      %v1731 = vsel %vm1004, %v924, %v1679
      %s1732 = scalar_lea.vmem %s3, 16
      %v1733 = vld [vmem:[%s1732] sm:$0xff]
      %1743 = vrot.lane.b32.xlu0 %v1723, 96
      %v1744 = vpop.permute.xlu0 %1743
      %1745 = vrot.lane.b32.xlu0 %v1724, 96
      %v1746 = vpop.permute.xlu0 %1745
      %1747 = vrot.lane.b32.xlu0 %v1725, 96
      %v1748 = vpop.permute.xlu0 %1747
      %1749 = vrot.lane.b32.xlu0 %v1726, 96
      %v1750 = vpop.permute.xlu0 %1749
      %1751 = vrot.lane.b32.xlu0 %v1727, 96
      %v1752 = vpop.permute.xlu0 %1751
      %1753 = vrot.lane.b32.xlu0 %v1728, 96
      %v1754 = vpop.permute.xlu0 %1753
      %1755 = vrot.lane.b32.xlu0 %v1729, 96
      %v1756 = vpop.permute.xlu0 %1755
      %1757 = vrot.lane.b32.xlu0 %v1730, 96
      %v1758 = vpop.permute.xlu0 %1757
      %1759 = vrot.lane.b32.xlu0 %v1731, 96
      %v1760 = vpop.permute.xlu0 %1759
      %1761 = vrot.lane.b32.xlu0 %v1715, 96
      %v1762 = vpop.permute.xlu0 %1761
      %1763 = vrot.lane.b32.xlu0 %v1716, 96
      %v1764 = vpop.permute.xlu0 %1763
      %1765 = vrot.lane.b32.xlu0 %v1717, 96
      %v1766 = vpop.permute.xlu0 %1765
      %1767 = vrot.lane.b32.xlu0 %v1718, 96
      %v1768 = vpop.permute.xlu0 %1767
      %1769 = vrot.lane.b32.xlu0 %v1719, 96
      %v1770 = vpop.permute.xlu0 %1769
      %1771 = vrot.lane.b32.xlu0 %v1720, 96
      %v1772 = vpop.permute.xlu0 %1771
      %1773 = vrot.lane.b32.xlu0 %v1721, 96
      %v1774 = vpop.permute.xlu0 %1773
      %1775 = vrot.lane.b32.xlu0 %v1722, 96
      %v1776 = vpop.permute.xlu0 %1775
      %1777 = vrot.lane.b32.xlu0 %v1714, 96
      %v1778 = vpop.permute.xlu0 %1777
      %v1779 = vsel %vm841, %v1744, %v1746
      %v1780 = vsel %vm841, %v1746, %v1748
      %v1781 = vsel %vm841, %v1748, %v1750
      %v1782 = vsel %vm841, %v1750, %v1752
      %v1783 = vsel %vm841, %v1752, %v1754
      %v1784 = vsel %vm841, %v1754, %v1756
      %v1785 = vsel %vm841, %v1756, %v1758
      %v1786 = vsel %vm841, %v1758, %v1760
      %v1787 = vsel %vm841, %v1762, %v1764
      %v1788 = vsel %vm841, %v1764, %v1766
      %v1789 = vsel %vm841, %v1766, %v1768
      %v1790 = vsel %vm841, %v1768, %v1770
      %v1791 = vsel %vm841, %v1770, %v1772
      %v1792 = vsel %vm841, %v1772, %v1774
      %v1793 = vsel %vm841, %v1774, %v1776
      %v1794 = vsel %vm841, %v1776, %v1778
      %v1804 = vsel %vm1084, %v1733, 0
      %v1806 = vsel %vm1004, %v1787, 0
      %v1808 = vsel %vm1004, %v1788, 0
      %v1810 = vsel %vm1004, %v1789, 0
      %v1812 = vsel %vm1004, %v1790, 0
      %v1814 = vsel %vm1004, %v1791, 0
      %v1816 = vsel %vm1004, %v1792, 0
      %v1818 = vsel %vm1004, %v1793, 0
      %v1820 = vsel %vm1004, %v1794, 0
      %1822 = vmatpush.msra.mxu0 0.0
      %1823 = vmatpush.msra.mxu0 0.0
      %1824 = vmatpush.msra.mxu0 0.0
      %1825 = vmatpush.msra.mxu0 0.0
      %1826 = vmatpush.msra.mxu0 0.0
      %1827 = vmatpush.msra.mxu0 0.0
      %1828 = vmatpush.msra.mxu0 0.0
      %1829 = vmatpush.msra.mxu0 0.0
      %1830 = vmatpush.msra.mxu0 0.0
      %1831 = vmatpush.msra.mxu0 0.0
      %1832 = vmatpush.msra.mxu0 0.0
      %1833 = vmatpush.msra.mxu0 0.0
      %1834 = vmatpush.msra.mxu0 0.0
      %1835 = vmatpush.msra.mxu0 0.0
      %1836 = vmatpush.msra.mxu0 %v1806
      %1837 = vmatpush.msra.mxu0 %v1779
      %1838 = vmatmul.f32.gmra.mxu0 %v1804
      %v1839 = vpop.f32.mrf.mxu0
      %v1840 = vadd.f32 0.0, %v1839
      %1841 = vdwg.mxu0
      %1842 = vmatpush.msra.mxu0 0.0
      %1843 = vmatpush.msra.mxu0 0.0
      %1844 = vmatpush.msra.mxu0 0.0
      %1845 = vmatpush.msra.mxu0 0.0
      %1846 = vmatpush.msra.mxu0 0.0
      %1847 = vmatpush.msra.mxu0 0.0
      %1848 = vmatpush.msra.mxu0 0.0
      %1849 = vmatpush.msra.mxu0 0.0
      %1850 = vmatpush.msra.mxu0 0.0
      %1851 = vmatpush.msra.mxu0 0.0
      %1852 = vmatpush.msra.mxu0 0.0
      %1853 = vmatpush.msra.mxu0 0.0
      %1854 = vmatpush.msra.mxu0 0.0
      %1855 = vmatpush.msra.mxu0 0.0
      %1856 = vmatpush.msra.mxu0 %v1808
      %1857 = vmatpush.msra.mxu0 %v1780
      %1858 = vmatmul.f32.gmra.mxu0 %v1804
      %v1859 = vpop.f32.mrf.mxu0
      %v1860 = vadd.f32 0.0, %v1859
      %1861 = vdwg.mxu0
      %1862 = vmatpush.msra.mxu0 0.0
      %1863 = vmatpush.msra.mxu0 0.0
      %1864 = vmatpush.msra.mxu0 0.0
      %1865 = vmatpush.msra.mxu0 0.0
      %1866 = vmatpush.msra.mxu0 0.0
      %1867 = vmatpush.msra.mxu0 0.0
      %1868 = vmatpush.msra.mxu0 0.0
      %1869 = vmatpush.msra.mxu0 0.0
      %1870 = vmatpush.msra.mxu0 0.0
      %1871 = vmatpush.msra.mxu0 0.0
      %1872 = vmatpush.msra.mxu0 0.0
      %1873 = vmatpush.msra.mxu0 0.0
      %1874 = vmatpush.msra.mxu0 0.0
      %1875 = vmatpush.msra.mxu0 0.0
      %1876 = vmatpush.msra.mxu0 %v1810
      %1877 = vmatpush.msra.mxu0 %v1781
      %1878 = vmatmul.f32.gmra.mxu0 %v1804
      %v1879 = vpop.f32.mrf.mxu0
      %v1880 = vadd.f32 0.0, %v1879
      %1881 = vdwg.mxu0
      %1882 = vmatpush.msra.mxu0 0.0
      %1883 = vmatpush.msra.mxu0 0.0
      %1884 = vmatpush.msra.mxu0 0.0
      %1885 = vmatpush.msra.mxu0 0.0
      %1886 = vmatpush.msra.mxu0 0.0
      %1887 = vmatpush.msra.mxu0 0.0
      %1888 = vmatpush.msra.mxu0 0.0
      %1889 = vmatpush.msra.mxu0 0.0
      %1890 = vmatpush.msra.mxu0 0.0
      %1891 = vmatpush.msra.mxu0 0.0
      %1892 = vmatpush.msra.mxu0 0.0
      %1893 = vmatpush.msra.mxu0 0.0
      %1894 = vmatpush.msra.mxu0 0.0
      %1895 = vmatpush.msra.mxu0 0.0
      %1896 = vmatpush.msra.mxu0 %v1812
      %1897 = vmatpush.msra.mxu0 %v1782
      %1898 = vmatmul.f32.gmra.mxu0 %v1804
      %v1899 = vpop.f32.mrf.mxu0
      %v1900 = vadd.f32 0.0, %v1899
      %1901 = vdwg.mxu0
      %1902 = vmatpush.msra.mxu0 0.0
      %1903 = vmatpush.msra.mxu0 0.0
      %1904 = vmatpush.msra.mxu0 0.0
      %1905 = vmatpush.msra.mxu0 0.0
      %1906 = vmatpush.msra.mxu0 0.0
      %1907 = vmatpush.msra.mxu0 0.0
      %1908 = vmatpush.msra.mxu0 0.0
      %1909 = vmatpush.msra.mxu0 0.0
      %1910 = vmatpush.msra.mxu0 0.0
      %1911 = vmatpush.msra.mxu0 0.0
      %1912 = vmatpush.msra.mxu0 0.0
      %1913 = vmatpush.msra.mxu0 0.0
      %1914 = vmatpush.msra.mxu0 0.0
      %1915 = vmatpush.msra.mxu0 0.0
      %1916 = vmatpush.msra.mxu0 %v1814
      %1917 = vmatpush.msra.mxu0 %v1783
      %1918 = vmatmul.f32.gmra.mxu0 %v1804
      %v1919 = vpop.f32.mrf.mxu0
      %v1920 = vadd.f32 0.0, %v1919
      %1921 = vdwg.mxu0
      %1922 = vmatpush.msra.mxu0 0.0
      %1923 = vmatpush.msra.mxu0 0.0
      %1924 = vmatpush.msra.mxu0 0.0
      %1925 = vmatpush.msra.mxu0 0.0
      %1926 = vmatpush.msra.mxu0 0.0
      %1927 = vmatpush.msra.mxu0 0.0
      %1928 = vmatpush.msra.mxu0 0.0
      %1929 = vmatpush.msra.mxu0 0.0
      %1930 = vmatpush.msra.mxu0 0.0
      %1931 = vmatpush.msra.mxu0 0.0
      %1932 = vmatpush.msra.mxu0 0.0
      %1933 = vmatpush.msra.mxu0 0.0
      %1934 = vmatpush.msra.mxu0 0.0
      %1935 = vmatpush.msra.mxu0 0.0
      %1936 = vmatpush.msra.mxu0 %v1816
      %1937 = vmatpush.msra.mxu0 %v1784
      %1938 = vmatmul.f32.gmra.mxu0 %v1804
      %v1939 = vpop.f32.mrf.mxu0
      %v1940 = vadd.f32 0.0, %v1939
      %1941 = vdwg.mxu0
      %1942 = vmatpush.msra.mxu0 0.0
      %1943 = vmatpush.msra.mxu0 0.0
      %1944 = vmatpush.msra.mxu0 0.0
      %1945 = vmatpush.msra.mxu0 0.0
      %1946 = vmatpush.msra.mxu0 0.0
      %1947 = vmatpush.msra.mxu0 0.0
      %1948 = vmatpush.msra.mxu0 0.0
      %1949 = vmatpush.msra.mxu0 0.0
      %1950 = vmatpush.msra.mxu0 0.0
      %1951 = vmatpush.msra.mxu0 0.0
      %1952 = vmatpush.msra.mxu0 0.0
      %1953 = vmatpush.msra.mxu0 0.0
      %1954 = vmatpush.msra.mxu0 0.0
      %1955 = vmatpush.msra.mxu0 0.0
      %1956 = vmatpush.msra.mxu0 %v1818
      %1957 = vmatpush.msra.mxu0 %v1785
      %1958 = vmatmul.f32.gmra.mxu0 %v1804
      %v1959 = vpop.f32.mrf.mxu0
      %v1960 = vadd.f32 0.0, %v1959
      %1961 = vdwg.mxu0
      %1962 = vmatpush.msra.mxu0 0.0
      %1963 = vmatpush.msra.mxu0 0.0
      %1964 = vmatpush.msra.mxu0 0.0
      %1965 = vmatpush.msra.mxu0 0.0
      %1966 = vmatpush.msra.mxu0 0.0
      %1967 = vmatpush.msra.mxu0 0.0
      %1968 = vmatpush.msra.mxu0 0.0
      %1969 = vmatpush.msra.mxu0 0.0
      %1970 = vmatpush.msra.mxu0 0.0
      %1971 = vmatpush.msra.mxu0 0.0
      %1972 = vmatpush.msra.mxu0 0.0
      %1973 = vmatpush.msra.mxu0 0.0
      %1974 = vmatpush.msra.mxu0 0.0
      %1975 = vmatpush.msra.mxu0 0.0
      %1976 = vmatpush.msra.mxu0 %v1820
      %1977 = vmatpush.msra.mxu0 %v1786
      %1978 = vmatmul.f32.gmra.mxu0 %v1804
      %v1979 = vpop.f32.mrf.mxu0
      %v1980 = vadd.f32 0.0, %v1979
      %1981 = vdwg.mxu0
      %s1982 = scalar_lea.vmem %s4, 1
      %v1983 = vld [vmem:[%s1982] ss:$2 sm:$0xff]
      %v1985 = vperm.slane %v1983, 0
      %v1986 = vperm.slane %v1983, 1
      %v1987 = vperm.slane %v1983, 2
      %v1988 = vperm.slane %v1983, 3
      %v1989 = vperm.slane %v1983, 4
      %v1990 = vperm.slane %v1983, 5
      %v1991 = vperm.slane %v1983, 6
      %v1992 = vperm.slane %v1983, 7
      %v2001 = vmul.f32 %v1840, %v1985
      %v2002 = vmul.f32 %v1860, %v1986
      %v2003 = vmul.f32 %v1880, %v1987
      %v2004 = vmul.f32 %v1900, %v1988
      %v2005 = vmul.f32 %v1920, %v1989
      %v2006 = vmul.f32 %v1940, %v1990
      %v2007 = vmul.f32 %v1960, %v1991
      %v2008 = vmul.f32 %v1980, %v1992
      %v2009 = vadd.f32 %v1636, %v2001
      %v2010 = vadd.f32 %v1637, %v2002
      %v2011 = vadd.f32 %v1638, %v2003
      %v2012 = vadd.f32 %v1639, %v2004
      %v2013 = vadd.f32 %v1640, %v2005
      %v2014 = vadd.f32 %v1641, %v2006
      %v2015 = vadd.f32 %v1642, %v2007
      %v2016 = vadd.f32 %v1643, %v2008
      %v2017 = vld [vmem:[%s5] sm:$0xff]
      %2019 = vset.pattern.permute.xlu0 0
      %2020 = vperm.xlu0 %2019, %v2017
      %v2021 = vpop.permute.xlu0 %2020
      %v2023 = vadd.f32 %v2009, %v2021
      %v2024 = vadd.f32 %v2010, %v2021
      %v2025 = vadd.f32 %v2011, %v2021
      %v2026 = vadd.f32 %v2012, %v2021
      %v2027 = vadd.f32 %v2013, %v2021
      %v2028 = vadd.f32 %v2014, %v2021
      %v2029 = vadd.f32 %v2015, %v2021
      %v2030 = vadd.f32 %v2016, %v2021
      %v2031 = vmax.f32 %v2023, 0.0
      %v2032 = vmax.f32 %v2024, 0.0
      %v2033 = vmax.f32 %v2025, 0.0
      %v2034 = vmax.f32 %v2026, 0.0
      %v2035 = vmax.f32 %v2027, 0.0
      %v2036 = vmax.f32 %v2028, 0.0
      %v2037 = vmax.f32 %v2029, 0.0
      %v2038 = vmax.f32 %v2030, 0.0
      %2039 = vst [vmem:[%s251] sm:$0xff] %v2031
      %2040 = vst [vmem:[%s251 + $0x8] sm:$0xff] %v2032
      %2041 = vst [vmem:[%s251 + $0x10] sm:$0xff] %v2033
      %2042 = vst [vmem:[%s251 + $0x18] sm:$0xff] %v2034
      %2043 = vst [vmem:[%s251 + $0x20] sm:$0xff] %v2035
      %2044 = vst [vmem:[%s251 + $0x28] sm:$0xff] %v2036
      %2045 = vst [vmem:[%s251 + $0x30] sm:$0xff] %v2037
      %2046 = vst [vmem:[%s251 + $0x38] sm:$0xff] %v2038
      %p2047 = scmp.lt.s32.totalorder %s17, 1
      %s2048 = scalar_select %p2047, %s17, 1
      %s2049 = smul.addr %s2048, 8
      %s2050 = smul.addr %s2049, 8
      %s2051 = scalar_lea.vmem %s6, %s2050
      // Predicated region
      $region45: #{forward.1} parent=43 // pred_check
        %p2052 = pneg %p166
      $region46: #{forward.1} parent=43 // pred_check_branch
        %2054 = sbr.rel (%p2052) target = $region48
      $region47: #{forward.1} parent=43 // pred_region
        _
      $region48: #{forward.1} parent=43 // pred_fallthru
        _
    $region44: #{forward.1} parent=5 // pred_fallthru
      _
    %p2055 = scmp.le.s32.totalorder 2, %s12
    // Predicated region
    $region49: #{forward.1} parent=5 // pred_check
      %p2056 = pneg %p2055
    $region50: #{forward.1} parent=5 // pred_check_branch
      %2058 = sbr.rel (%p2056) target = $region52
    $region51: #{forward.1} parent=5 // pred_region
      %s2059 = ssub.s32 %s12, 2
      // Predicated region
      $region53: #{forward.1} parent=51 // pred_check
        %p2060 = pneg %p172
      $region54: #{forward.1} parent=51 // pred_check_branch
        %2062 = sbr.rel (%p2060) target = $region56
      $region55: #{forward.1} parent=51 // pred_region
        %p2063 = scmp.lt.s32.totalorder %s18, 1
        %s2064 = scalar_select %p2063, %s18, 1
        %s2065 = smul.addr %s2064, 8
        %s2066 = smul.addr %s2065, 8
        %s2067 = scalar_lea.vmem %s6, %s2066
      $region56: #{forward.1} parent=51 // pred_fallthru
        _
    $region52: #{forward.1} parent=5 // pred_fallthru
      _
  $region6: #{forward.1} parent=0 // loop_footer
    %s16 = sadd.s32 1, %s12
  $region7: #{forward.1} parent=0 // loop_footer_branch
    %11 = sbr.rel target = $region3
  $region8: #{forward.1} parent=0 // loop_exit
    _

</llo_original>
